<compile_context>
chip_gen: v6e
topology: v6e:2x2x1
jax: 0.10.0
libtpu: 0.0.40
codegen_flags: <defaults>
</compile_context>

<pallas_src>
import jax
import jax.numpy as jnp
from jax import lax
from jax.experimental import pallas as pl
from jax.experimental.pallas import tpu as pltpu  # noqa: F401  (TPU backend)


def _episodic_memory_kernel(
    facts_ref,   # (B, S, H)  f32
    qmqm_ref,    # (B, 4H)    f32   [q | m | q | m]
    wz1_ref,     # (4H, H)    bf16  z1 weight (transposed)
    wrw_ref,     # (H, 2H)    bf16  [Wr | W] fused fact-side AGRU weight
    uruu_ref,    # (H, 2H)    bf16  [Ur | U] fused recurrent AGRU weight
    wnm_ref,     # (3H, H)    bf16  next_mem weight rows reordered as [m ; q ; C]
    vecs_ref,    # (8, 2H)    f32   row0=[bz1|0] row1=[wz2|0] row2=[br+bur|bw]
                 #                  row3=[bu|0]  row4=[bnm|0] rows5..7 = 0
    out_ref,     # (B, H)     f32
):
    facts = facts_ref[...]                          # (B, S, H) f32
    qmqm = qmqm_ref[...]                            # (B, 4H)   f32
    B, S, H = facts.shape
    BS = B * S
    H4 = 4 * H

    vecs = vecs_ref[...]                            # (8, 2H) f32
    bz1 = vecs[0:1, 0:H]                            # (1, H)
    wz2row = vecs[1:2, 0:H]                         # (1, H)  z2 weight as a row (VPU path)
    xbias = vecs[2:3, :]                            # (1, 2H) [br+bur | bw]
    bu = vecs[3:4, 0:H]                             # (1, H)
    bnm = vecs[4:5, 0:H]                            # (1, H)

    # ---- attention gate G: one K=4H matmul ---------------------------------
    f2 = facts.reshape(BS, H)
    f4 = jnp.concatenate([f2, f2, f2, f2], axis=-1)                 # (BS, 4H) lane-tiled facts
    qm4 = jnp.broadcast_to(qmqm[:, None, :], (B, S, H4)).reshape(BS, H4)
    prod = f4 * qm4                                                 # [f*q | f*m | f*q | f*m]
    diff = jnp.abs(f4 - qm4)                                        # [|f-q| | |f-m| | ...]
    lane = lax.broadcasted_iota(jnp.int32, (BS, H4), 1)
    z = jnp.where(lane < 2 * H, prod, diff)                         # [f*q | f*m | |f-q| | |f-m|]

    g_pre = (
        jnp.dot(z.astype(jnp.bfloat16), wz1_ref[...],
                preferred_element_type=jnp.float32)
        + bz1
    )                                                               # (BS, H) f32 accum
    g_hid = jnp.tanh(g_pre).reshape(B, S, H)

    # N=1 projection on VPU/XLU (multiply + lane reduce); bz2 dropped — softmax
    # over sentences is shift-invariant so a constant logit offset cancels.
    g_logits = jnp.sum(g_hid * wz2row[None, :, :], axis=-1)         # (B, S)

    g_max = jnp.max(g_logits, axis=1, keepdims=True)
    g_exp = jnp.exp(g_logits - g_max)
    denom = jnp.sum(g_exp, axis=1, keepdims=True)                   # (B, 1)
    inv = pl.reciprocal(denom, approx=True)                         # EUP (free slot)
    inv = inv * (2.0 - denom * inv)                                 # 1 Newton step
    G = g_exp * inv                                                 # (B, S)

    # ---- AttentionGRU -------------------------------------------------------
    # One fused fact-side projection: facts @ [Wr|W] + [br+bur | bw].
    xrw = (
        jnp.dot(f2.astype(jnp.bfloat16), wrw_ref[...],
                preferred_element_type=jnp.float32)
        + xbias
    ).reshape(B, S, 2 * H)

    uruu = uruu_ref[...]                                            # (H, 2H) bf16
    bu_b = jnp.broadcast_to(bu, (B, H))                             # hoisted out of the loop

    C = jnp.zeros((B, H), dtype=jnp.float32)
    for sid in range(S):
        # Single fused recurrent MXU push per timestep (C @ [Ur|U]).
        cu = jnp.dot(C.astype(jnp.bfloat16), uruu,
                     preferred_element_type=jnp.float32)            # (B, 2H)
        t = xrw[:, sid, :]                                          # (B, 2H) [xr | xw]
        r = jax.nn.sigmoid(t[:, :H] + cu[:, :H])
        h_tilda = jnp.tanh(t[:, H:] + r * (cu[:, H:] + bu_b))
        g = G[:, sid:sid + 1]                                       # (B, 1)
        C = g * h_tilda + (1.0 - g) * C

    # ---- next memory: relu([m | q | C] @ Wnm_reordered + b), one K=3H matmul
    mqc = jnp.concatenate([qmqm[:, H:3 * H], C], axis=-1)           # (B, 3H) = [m | q | C]
    nm = (
        jnp.dot(mqc.astype(jnp.bfloat16), wnm_ref[...],
                preferred_element_type=jnp.float32)
        + bnm
    )
    out_ref[...] = jnp.maximum(nm, 0.0).astype(out_ref.dtype)


def _full_spec(shape):
    return pl.BlockSpec(shape, lambda: (0,) * len(shape))


def pack_params(params):
    """One-time weight re-layout / bf16 cast / bias packing.

    Call once and reuse across forward calls so the per-step path carries no
    slicing / concatenation HLO or extra HBM temporaries.
    """
    H = params['bz1'].shape[1]
    wnm = params['wnm_t']                                           # (3H, H): [m ; C ; q] rows
    vecs = jnp.zeros((8, 2 * H), jnp.float32)
    vecs = vecs.at[0, :H].set(params['bz1'][0])
    vecs = vecs.at[1, :H].set(params['wz2_t'][:, 0])
    vecs = vecs.at[2, :H].set(params['br'][0] + params['bur'][0])
    vecs = vecs.at[2, H:].set(params['bw'][0])
    vecs = vecs.at[3, :H].set(params['bu'][0])
    vecs = vecs.at[4, :H].set(params['bnm'][0])
    return {
        'H': H,
        'wz1': params['wz1_t'].astype(jnp.bfloat16),                                # (4H, H)
        'wrw': jnp.concatenate([params['wr_t'], params['ww_t']], axis=1
                               ).astype(jnp.bfloat16),                              # (H, 2H)
        'uruu': jnp.concatenate([params['ur_t'], params['uu_t']], axis=1
                                ).astype(jnp.bfloat16),                             # (H, 2H)
        # reorder rows so the kernel operand can be the contiguous [m | q | C]:
        'wnm': jnp.concatenate([wnm[:H], wnm[2 * H:], wnm[H:2 * H]], axis=0
                               ).astype(jnp.bfloat16),                              # (3H, H)
        'vecs': vecs,
    }


def episodic_memory_forward(facts, questions, prevM, packed):
    """facts: (B, S, H); questions/prevM: (B, 1, H). Returns (B, 1, H)."""
    B, S, H = facts.shape
    q = questions.reshape(B, H).astype(jnp.float32)
    m = prevM.reshape(B, H).astype(jnp.float32)
    qmqm = jnp.concatenate([q, m, q, m], axis=-1)                   # (B, 4H)

    args = (
        facts.astype(jnp.float32), qmqm,
        packed['wz1'], packed['wrw'], packed['uruu'], packed['wnm'], packed['vecs'],
    )

    out = pl.pallas_call(
        _episodic_memory_kernel,
        out_shape=jax.ShapeDtypeStruct((B, H), jnp.float32),
        in_specs=[_full_spec(a.shape) for a in args],
        out_specs=_full_spec((B, H)),
    )(*args)
    return out.reshape(B, 1, H)


# ------------------------- reference (pure JAX) ------------------------------
def episodic_memory_reference(facts, questions, prevM, p):
    B, S, H = facts.shape
    q = jnp.broadcast_to(questions, facts.shape)
    m = jnp.broadcast_to(prevM, facts.shape)
    z = jnp.concatenate(
        [facts * q, facts * m, jnp.abs(facts - q), jnp.abs(facts - m)], axis=2
    ).reshape(-1, 4 * H)
    G = jnp.tanh(z @ p['wz1_t'] + p['bz1'][0])
    G = (G @ p['wz2_t'] + p['bz2'][0]).reshape(B, S)
    G = jax.nn.softmax(G, axis=1)

    C = jnp.zeros((B, H), jnp.float32)
    for sid in range(S):
        fact = facts[:, sid, :]
        g = G[:, sid][:, None]
        r = jax.nn.sigmoid(fact @ p['wr_t'] + p['br'][0] + C @ p['ur_t'] + p['bur'][0])
        h_tilda = jnp.tanh(fact @ p['ww_t'] + p['bw'][0]
                           + r * (C @ p['uu_t'] + p['bu'][0]))
        C = g * h_tilda + (1.0 - g) * C
    concat = jnp.concatenate([prevM[:, 0, :], C, questions[:, 0, :]], axis=1)
    nm = jax.nn.relu(concat @ p['wnm_t'] + p['bnm'][0])
    return nm[:, None, :]


# ------------------------------- setup ---------------------------------------
def _xavier_normal(key, fan_in, fan_out):
    std = (2.0 / (fan_in + fan_out)) ** 0.5
    # returns transposed layout (in, out) so kernel does x @ W
    return std * jax.random.normal(key, (fan_in, fan_out), dtype=jnp.float32)


def make_params(key, H):
    keys = jax.random.split(key, 16)
    return {
        'wz1_t': _xavier_normal(keys[0], 4 * H, H),
        'bz1':   0.01 * jax.random.normal(keys[1], (1, H), jnp.float32),
        'wz2_t': _xavier_normal(keys[2], H, 1),
        'bz2':   0.01 * jax.random.normal(keys[3], (1, 1), jnp.float32),
        'wr_t':  _xavier_normal(keys[4], H, H),
        'br':    0.01 * jax.random.normal(keys[5], (1, H), jnp.float32),
        'ur_t':  _xavier_normal(keys[6], H, H),
        'bur':   0.01 * jax.random.normal(keys[7], (1, H), jnp.float32),
        'ww_t':  _xavier_normal(keys[8], H, H),
        'bw':    0.01 * jax.random.normal(keys[9], (1, H), jnp.float32),
        'uu_t':  _xavier_normal(keys[10], H, H),
        'bu':    0.01 * jax.random.normal(keys[11], (1, H), jnp.float32),
        'wnm_t': _xavier_normal(keys[12], 3 * H, H),
        'bnm':   0.01 * jax.random.normal(keys[13], (1, H), jnp.float32),
    }


if __name__ == "__main__":
    B, S, H = 2, 8, 32
    key = jax.random.PRNGKey(0)
    k_facts, k_q, k_m, k_p = jax.random.split(key, 4)

    facts = jax.random.normal(k_facts, (B, S, H), dtype=jnp.float32)
    questions = jax.random.normal(k_q, (B, 1, H), dtype=jnp.float32)
    prevM = jax.random.normal(k_m, (B, 1, H), dtype=jnp.float32)
    params = make_params(k_p, H)
    packed = pack_params(params)   # one-time weight re-layout, cached across calls

    out = episodic_memory_forward(facts, questions, prevM, packed)
    out = jax.block_until_ready(out)

    ref = episodic_memory_reference(facts, questions, prevM, params)
    assert out.shape == (B, 1, H)
    # bf16 MXU operands (explicit, single-pass) -> bf16-level matmul tolerance.
    assert jnp.allclose(out, ref, atol=5e-3, rtol=5e-3), "mismatch vs reference"

    print("KERNEL_OK")
</pallas_src>

<mosaic_0001>
module attributes {stable_mosaic.version = 11 : i64} {
  func.func @_episodic_memory_kernel(%arg0: memref<2x8x32xf32, #tpu.memory_space<vmem>>, %arg1: memref<2x128xf32, #tpu.memory_space<vmem>>, %arg2: memref<128x32xbf16, #tpu.memory_space<vmem>>, %arg3: memref<32x64xbf16, #tpu.memory_space<vmem>>, %arg4: memref<32x64xbf16, #tpu.memory_space<vmem>>, %arg5: memref<96x32xbf16, #tpu.memory_space<vmem>>, %arg6: memref<8x64xf32, #tpu.memory_space<vmem>>, %arg7: memref<2x32xf32, #tpu.memory_space<vmem>>) attributes {dimension_semantics = [], scalar_prefetch = 0 : i64, scratch_operands = 0 : i64, tpu.core_type = #tpu.core_type<tc>} {
    %c0 = arith.constant 0 : index
    %c0_0 = arith.constant 0 : index
    %c0_1 = arith.constant 0 : index
    %0 = vector.load %arg0[%c0, %c0_0, %c0_1] : memref<2x8x32xf32, #tpu.memory_space<vmem>>, vector<2x8x32xf32>
    %c0_2 = arith.constant 0 : index
    %c0_3 = arith.constant 0 : index
    %1 = vector.load %arg1[%c0_2, %c0_3] : memref<2x128xf32, #tpu.memory_space<vmem>>, vector<2x128xf32>
    %c0_4 = arith.constant 0 : index
    %c0_5 = arith.constant 0 : index
    %2 = vector.load %arg6[%c0_4, %c0_5] : memref<8x64xf32, #tpu.memory_space<vmem>>, vector<8x64xf32>
    %3 = vector.extract_strided_slice %2 {offsets = [0, 0], sizes = [1, 32], strides = [1, 1]} : vector<8x64xf32> to vector<1x32xf32>
    %4 = vector.extract_strided_slice %2 {offsets = [1, 0], sizes = [1, 32], strides = [1, 1]} : vector<8x64xf32> to vector<1x32xf32>
    %5 = vector.extract_strided_slice %2 {offsets = [2, 0], sizes = [1, 64], strides = [1, 1]} : vector<8x64xf32> to vector<1x64xf32>
    %6 = vector.extract_strided_slice %2 {offsets = [3, 0], sizes = [1, 32], strides = [1, 1]} : vector<8x64xf32> to vector<1x32xf32>
    %7 = vector.extract_strided_slice %2 {offsets = [4, 0], sizes = [1, 32], strides = [1, 1]} : vector<8x64xf32> to vector<1x32xf32>
    %8 = vector.shape_cast %0 : vector<2x8x32xf32> to vector<16x32xf32>
    %9 = tpu.concatenate %8, %8, %8, %8 in 1 : vector<16x32xf32>, vector<16x32xf32>, vector<16x32xf32>, vector<16x32xf32> -> vector<16x128xf32>
    %10 = vector.shape_cast %1 : vector<2x128xf32> to vector<2x1x128xf32>
    %11 = vector.shape_cast %10 : vector<2x1x128xf32> to vector<2x1x128xf32>
    %12 = vector.broadcast %11 : vector<2x1x128xf32> to vector<2x8x128xf32>
    %13 = vector.shape_cast %12 : vector<2x8x128xf32> to vector<16x128xf32>
    %14 = arith.mulf %9, %13 : vector<16x128xf32>
    %15 = arith.subf %9, %13 : vector<16x128xf32>
    %16 = math.absf %15 : vector<16x128xf32>
    %17 = tpu.iota {dimensions = array<i32: 1>} : vector<16x128xi32>
    %c64_i32 = arith.constant 64 : i32
    %18 = vector.broadcast %c64_i32 : i32 to vector<16x128xi32>
    %19 = arith.cmpi slt, %17, %18 : vector<16x128xi32>
    %20 = arith.select %19, %14, %16 : vector<16x128xi1>, vector<16x128xf32>
    %21 = arith.truncf %20 : vector<16x128xf32> to vector<16x128xbf16>
    %c0_6 = arith.constant 0 : index
    %c0_7 = arith.constant 0 : index
    %22 = vector.load %arg2[%c0_6, %c0_7] : memref<128x32xbf16, #tpu.memory_space<vmem>>, vector<128x32xbf16>
    %cst = arith.constant dense<0.000000e+00> : vector<16x32xf32>
    %23 = tpu.matmul %21, %22, %cst {dimension_numbers = #tpu.dot_dimension_numbers<[1], [0], [0], [1], [0, 0, 1, 1], [], []>} : vector<16x128xbf16>, vector<128x32xbf16>, vector<16x32xf32> -> vector<16x32xf32>
    %24 = vector.broadcast %3 : vector<1x32xf32> to vector<16x32xf32>
    %25 = arith.addf %23, %24 : vector<16x32xf32>
    %26 = math.tanh %25 : vector<16x32xf32>
    %27 = vector.shape_cast %26 : vector<16x32xf32> to vector<2x8x32xf32>
    %28 = vector.shape_cast %4 : vector<1x32xf32> to vector<1x1x32xf32>
    %29 = vector.broadcast %28 : vector<1x1x32xf32> to vector<2x8x32xf32>
    %30 = arith.mulf %27, %29 : vector<2x8x32xf32>
    %cst_8 = arith.constant dense<0.000000e+00> : vector<2x8xf32>
    %31 = vector.multi_reduction <add>, %30, %cst_8 [2] : vector<2x8x32xf32> to vector<2x8xf32>
    %cst_9 = arith.constant dense<0xFF800000> : vector<2xf32>
    %32 = vector.multi_reduction <maximumf>, %31, %cst_9 [1] : vector<2x8xf32> to vector<2xf32>
    %33 = vector.shape_cast %32 : vector<2xf32> to vector<2x1xf32>
    %34 = vector.broadcast %33 : vector<2x1xf32> to vector<2x8xf32>
    %35 = arith.subf %31, %34 : vector<2x8xf32>
    %36 = math.exp %35 : vector<2x8xf32>
    %cst_10 = arith.constant dense<0.000000e+00> : vector<2xf32>
    %37 = vector.multi_reduction <add>, %36, %cst_10 [1] : vector<2x8xf32> to vector<2xf32>
    %38 = vector.shape_cast %37 : vector<2xf32> to vector<2x1xf32>
    %39 = tpu.reciprocal %38 {approx = true} : vector<2x1xf32> -> vector<2x1xf32>
    %40 = arith.mulf %38, %39 : vector<2x1xf32>
    %cst_11 = arith.constant 2.000000e+00 : f32
    %41 = vector.broadcast %cst_11 : f32 to vector<2x1xf32>
    %42 = arith.subf %41, %40 : vector<2x1xf32>
    %43 = arith.mulf %39, %42 : vector<2x1xf32>
    %44 = vector.broadcast %43 : vector<2x1xf32> to vector<2x8xf32>
    %45 = arith.mulf %36, %44 : vector<2x8xf32>
    %46 = arith.truncf %8 : vector<16x32xf32> to vector<16x32xbf16>
    %c0_12 = arith.constant 0 : index
    %c0_13 = arith.constant 0 : index
    %47 = vector.load %arg3[%c0_12, %c0_13] : memref<32x64xbf16, #tpu.memory_space<vmem>>, vector<32x64xbf16>
    %cst_14 = arith.constant dense<0.000000e+00> : vector<16x64xf32>
    %48 = tpu.matmul %46, %47, %cst_14 {dimension_numbers = #tpu.dot_dimension_numbers<[1], [0], [0], [1], [0, 0, 1, 1], [], []>} : vector<16x32xbf16>, vector<32x64xbf16>, vector<16x64xf32> -> vector<16x64xf32>
    %49 = vector.broadcast %5 : vector<1x64xf32> to vector<16x64xf32>
    %50 = arith.addf %48, %49 : vector<16x64xf32>
    %51 = vector.shape_cast %50 : vector<16x64xf32> to vector<2x8x64xf32>
    %c0_15 = arith.constant 0 : index
    %c0_16 = arith.constant 0 : index
    %52 = vector.load %arg4[%c0_15, %c0_16] : memref<32x64xbf16, #tpu.memory_space<vmem>>, vector<32x64xbf16>
    %53 = vector.shape_cast %6 : vector<1x32xf32> to vector<1x32xf32>
    %54 = vector.broadcast %53 : vector<1x32xf32> to vector<2x32xf32>
    %cst_17 = arith.constant 0.000000e+00 : f32
    %55 = vector.broadcast %cst_17 : f32 to vector<2x32xf32>
    %56 = arith.truncf %55 : vector<2x32xf32> to vector<2x32xbf16>
    %cst_18 = arith.constant dense<0.000000e+00> : vector<2x64xf32>
    %57 = tpu.matmul %56, %52, %cst_18 {dimension_numbers = #tpu.dot_dimension_numbers<[1], [0], [0], [1], [0, 0, 1, 1], [], []>} : vector<2x32xbf16>, vector<32x64xbf16>, vector<2x64xf32> -> vector<2x64xf32>
    %58 = vector.extract_strided_slice %51 {offsets = [0, 0, 0], sizes = [2, 1, 64], strides = [1, 1, 1]} : vector<2x8x64xf32> to vector<2x1x64xf32>
    %59 = vector.shape_cast %58 : vector<2x1x64xf32> to vector<2x64xf32>
    %60 = vector.extract_strided_slice %59 {offsets = [0, 0], sizes = [2, 32], strides = [1, 1]} : vector<2x64xf32> to vector<2x32xf32>
    %61 = vector.extract_strided_slice %57 {offsets = [0, 0], sizes = [2, 32], strides = [1, 1]} : vector<2x64xf32> to vector<2x32xf32>
    %62 = arith.addf %60, %61 : vector<2x32xf32>
    %63 = arith.negf %62 : vector<2x32xf32>
    %64 = math.exp %63 : vector<2x32xf32>
    %cst_19 = arith.constant 1.000000e+00 : f32
    %65 = vector.broadcast %cst_19 : f32 to vector<2x32xf32>
    %66 = arith.addf %65, %64 : vector<2x32xf32>
    %67 = arith.divf %65, %66 : vector<2x32xf32>
    %68 = vector.extract_strided_slice %59 {offsets = [0, 32], sizes = [2, 32], strides = [1, 1]} : vector<2x64xf32> to vector<2x32xf32>
    %69 = vector.extract_strided_slice %57 {offsets = [0, 32], sizes = [2, 32], strides = [1, 1]} : vector<2x64xf32> to vector<2x32xf32>
    %70 = arith.addf %69, %54 : vector<2x32xf32>
    %71 = arith.mulf %67, %70 : vector<2x32xf32>
    %72 = arith.addf %68, %71 : vector<2x32xf32>
    %73 = math.tanh %72 : vector<2x32xf32>
    %74 = vector.extract_strided_slice %45 {offsets = [0, 0], sizes = [2, 1], strides = [1, 1]} : vector<2x8xf32> to vector<2x1xf32>
    %75 = vector.broadcast %74 : vector<2x1xf32> to vector<2x32xf32>
    %76 = arith.mulf %75, %73 : vector<2x32xf32>
    %cst_20 = arith.constant 1.000000e+00 : f32
    %77 = vector.broadcast %cst_20 : f32 to vector<2x1xf32>
    %78 = arith.subf %77, %74 : vector<2x1xf32>
    %79 = vector.broadcast %78 : vector<2x1xf32> to vector<2x32xf32>
    %80 = arith.mulf %79, %55 : vector<2x32xf32>
    %81 = arith.addf %76, %80 : vector<2x32xf32>
    %82 = arith.truncf %81 : vector<2x32xf32> to vector<2x32xbf16>
    %cst_21 = arith.constant dense<0.000000e+00> : vector<2x64xf32>
    %83 = tpu.matmul %82, %52, %cst_21 {dimension_numbers = #tpu.dot_dimension_numbers<[1], [0], [0], [1], [0, 0, 1, 1], [], []>} : vector<2x32xbf16>, vector<32x64xbf16>, vector<2x64xf32> -> vector<2x64xf32>
    %84 = vector.extract_strided_slice %51 {offsets = [0, 1, 0], sizes = [2, 1, 64], strides = [1, 1, 1]} : vector<2x8x64xf32> to vector<2x1x64xf32>
    %85 = vector.shape_cast %84 : vector<2x1x64xf32> to vector<2x64xf32>
    %86 = vector.extract_strided_slice %85 {offsets = [0, 0], sizes = [2, 32], strides = [1, 1]} : vector<2x64xf32> to vector<2x32xf32>
    %87 = vector.extract_strided_slice %83 {offsets = [0, 0], sizes = [2, 32], strides = [1, 1]} : vector<2x64xf32> to vector<2x32xf32>
    %88 = arith.addf %86, %87 : vector<2x32xf32>
    %89 = arith.negf %88 : vector<2x32xf32>
    %90 = math.exp %89 : vector<2x32xf32>
    %cst_22 = arith.constant 1.000000e+00 : f32
    %91 = vector.broadcast %cst_22 : f32 to vector<2x32xf32>
    %92 = arith.addf %91, %90 : vector<2x32xf32>
    %93 = arith.divf %91, %92 : vector<2x32xf32>
    %94 = vector.extract_strided_slice %85 {offsets = [0, 32], sizes = [2, 32], strides = [1, 1]} : vector<2x64xf32> to vector<2x32xf32>
    %95 = vector.extract_strided_slice %83 {offsets = [0, 32], sizes = [2, 32], strides = [1, 1]} : vector<2x64xf32> to vector<2x32xf32>
    %96 = arith.addf %95, %54 : vector<2x32xf32>
    %97 = arith.mulf %93, %96 : vector<2x32xf32>
    %98 = arith.addf %94, %97 : vector<2x32xf32>
    %99 = math.tanh %98 : vector<2x32xf32>
    %100 = vector.extract_strided_slice %45 {offsets = [0, 1], sizes = [2, 1], strides = [1, 1]} : vector<2x8xf32> to vector<2x1xf32>
    %101 = vector.broadcast %100 : vector<2x1xf32> to vector<2x32xf32>
    %102 = arith.mulf %101, %99 : vector<2x32xf32>
    %cst_23 = arith.constant 1.000000e+00 : f32
    %103 = vector.broadcast %cst_23 : f32 to vector<2x1xf32>
    %104 = arith.subf %103, %100 : vector<2x1xf32>
    %105 = vector.broadcast %104 : vector<2x1xf32> to vector<2x32xf32>
    %106 = arith.mulf %105, %81 : vector<2x32xf32>
    %107 = arith.addf %102, %106 : vector<2x32xf32>
    %108 = arith.truncf %107 : vector<2x32xf32> to vector<2x32xbf16>
    %cst_24 = arith.constant dense<0.000000e+00> : vector<2x64xf32>
    %109 = tpu.matmul %108, %52, %cst_24 {dimension_numbers = #tpu.dot_dimension_numbers<[1], [0], [0], [1], [0, 0, 1, 1], [], []>} : vector<2x32xbf16>, vector<32x64xbf16>, vector<2x64xf32> -> vector<2x64xf32>
    %110 = vector.extract_strided_slice %51 {offsets = [0, 2, 0], sizes = [2, 1, 64], strides = [1, 1, 1]} : vector<2x8x64xf32> to vector<2x1x64xf32>
    %111 = vector.shape_cast %110 : vector<2x1x64xf32> to vector<2x64xf32>
    %112 = vector.extract_strided_slice %111 {offsets = [0, 0], sizes = [2, 32], strides = [1, 1]} : vector<2x64xf32> to vector<2x32xf32>
    %113 = vector.extract_strided_slice %109 {offsets = [0, 0], sizes = [2, 32], strides = [1, 1]} : vector<2x64xf32> to vector<2x32xf32>
    %114 = arith.addf %112, %113 : vector<2x32xf32>
    %115 = arith.negf %114 : vector<2x32xf32>
    %116 = math.exp %115 : vector<2x32xf32>
    %cst_25 = arith.constant 1.000000e+00 : f32
    %117 = vector.broadcast %cst_25 : f32 to vector<2x32xf32>
    %118 = arith.addf %117, %116 : vector<2x32xf32>
    %119 = arith.divf %117, %118 : vector<2x32xf32>
    %120 = vector.extract_strided_slice %111 {offsets = [0, 32], sizes = [2, 32], strides = [1, 1]} : vector<2x64xf32> to vector<2x32xf32>
    %121 = vector.extract_strided_slice %109 {offsets = [0, 32], sizes = [2, 32], strides = [1, 1]} : vector<2x64xf32> to vector<2x32xf32>
    %122 = arith.addf %121, %54 : vector<2x32xf32>
    %123 = arith.mulf %119, %122 : vector<2x32xf32>
    %124 = arith.addf %120, %123 : vector<2x32xf32>
    %125 = math.tanh %124 : vector<2x32xf32>
    %126 = vector.extract_strided_slice %45 {offsets = [0, 2], sizes = [2, 1], strides = [1, 1]} : vector<2x8xf32> to vector<2x1xf32>
    %127 = vector.broadcast %126 : vector<2x1xf32> to vector<2x32xf32>
    %128 = arith.mulf %127, %125 : vector<2x32xf32>
    %cst_26 = arith.constant 1.000000e+00 : f32
    %129 = vector.broadcast %cst_26 : f32 to vector<2x1xf32>
    %130 = arith.subf %129, %126 : vector<2x1xf32>
    %131 = vector.broadcast %130 : vector<2x1xf32> to vector<2x32xf32>
    %132 = arith.mulf %131, %107 : vector<2x32xf32>
    %133 = arith.addf %128, %132 : vector<2x32xf32>
    %134 = arith.truncf %133 : vector<2x32xf32> to vector<2x32xbf16>
    %cst_27 = arith.constant dense<0.000000e+00> : vector<2x64xf32>
    %135 = tpu.matmul %134, %52, %cst_27 {dimension_numbers = #tpu.dot_dimension_numbers<[1], [0], [0], [1], [0, 0, 1, 1], [], []>} : vector<2x32xbf16>, vector<32x64xbf16>, vector<2x64xf32> -> vector<2x64xf32>
    %136 = vector.extract_strided_slice %51 {offsets = [0, 3, 0], sizes = [2, 1, 64], strides = [1, 1, 1]} : vector<2x8x64xf32> to vector<2x1x64xf32>
    %137 = vector.shape_cast %136 : vector<2x1x64xf32> to vector<2x64xf32>
    %138 = vector.extract_strided_slice %137 {offsets = [0, 0], sizes = [2, 32], strides = [1, 1]} : vector<2x64xf32> to vector<2x32xf32>
    %139 = vector.extract_strided_slice %135 {offsets = [0, 0], sizes = [2, 32], strides = [1, 1]} : vector<2x64xf32> to vector<2x32xf32>
    %140 = arith.addf %138, %139 : vector<2x32xf32>
    %141 = arith.negf %140 : vector<2x32xf32>
    %142 = math.exp %141 : vector<2x32xf32>
    %cst_28 = arith.constant 1.000000e+00 : f32
    %143 = vector.broadcast %cst_28 : f32 to vector<2x32xf32>
    %144 = arith.addf %143, %142 : vector<2x32xf32>
    %145 = arith.divf %143, %144 : vector<2x32xf32>
    %146 = vector.extract_strided_slice %137 {offsets = [0, 32], sizes = [2, 32], strides = [1, 1]} : vector<2x64xf32> to vector<2x32xf32>
    %147 = vector.extract_strided_slice %135 {offsets = [0, 32], sizes = [2, 32], strides = [1, 1]} : vector<2x64xf32> to vector<2x32xf32>
    %148 = arith.addf %147, %54 : vector<2x32xf32>
    %149 = arith.mulf %145, %148 : vector<2x32xf32>
    %150 = arith.addf %146, %149 : vector<2x32xf32>
    %151 = math.tanh %150 : vector<2x32xf32>
    %152 = vector.extract_strided_slice %45 {offsets = [0, 3], sizes = [2, 1], strides = [1, 1]} : vector<2x8xf32> to vector<2x1xf32>
    %153 = vector.broadcast %152 : vector<2x1xf32> to vector<2x32xf32>
    %154 = arith.mulf %153, %151 : vector<2x32xf32>
    %cst_29 = arith.constant 1.000000e+00 : f32
    %155 = vector.broadcast %cst_29 : f32 to vector<2x1xf32>
    %156 = arith.subf %155, %152 : vector<2x1xf32>
    %157 = vector.broadcast %156 : vector<2x1xf32> to vector<2x32xf32>
    %158 = arith.mulf %157, %133 : vector<2x32xf32>
    %159 = arith.addf %154, %158 : vector<2x32xf32>
    %160 = arith.truncf %159 : vector<2x32xf32> to vector<2x32xbf16>
    %cst_30 = arith.constant dense<0.000000e+00> : vector<2x64xf32>
    %161 = tpu.matmul %160, %52, %cst_30 {dimension_numbers = #tpu.dot_dimension_numbers<[1], [0], [0], [1], [0, 0, 1, 1], [], []>} : vector<2x32xbf16>, vector<32x64xbf16>, vector<2x64xf32> -> vector<2x64xf32>
    %162 = vector.extract_strided_slice %51 {offsets = [0, 4, 0], sizes = [2, 1, 64], strides = [1, 1, 1]} : vector<2x8x64xf32> to vector<2x1x64xf32>
    %163 = vector.shape_cast %162 : vector<2x1x64xf32> to vector<2x64xf32>
    %164 = vector.extract_strided_slice %163 {offsets = [0, 0], sizes = [2, 32], strides = [1, 1]} : vector<2x64xf32> to vector<2x32xf32>
    %165 = vector.extract_strided_slice %161 {offsets = [0, 0], sizes = [2, 32], strides = [1, 1]} : vector<2x64xf32> to vector<2x32xf32>
    %166 = arith.addf %164, %165 : vector<2x32xf32>
    %167 = arith.negf %166 : vector<2x32xf32>
    %168 = math.exp %167 : vector<2x32xf32>
    %cst_31 = arith.constant 1.000000e+00 : f32
    %169 = vector.broadcast %cst_31 : f32 to vector<2x32xf32>
    %170 = arith.addf %169, %168 : vector<2x32xf32>
    %171 = arith.divf %169, %170 : vector<2x32xf32>
    %172 = vector.extract_strided_slice %163 {offsets = [0, 32], sizes = [2, 32], strides = [1, 1]} : vector<2x64xf32> to vector<2x32xf32>
    %173 = vector.extract_strided_slice %161 {offsets = [0, 32], sizes = [2, 32], strides = [1, 1]} : vector<2x64xf32> to vector<2x32xf32>
    %174 = arith.addf %173, %54 : vector<2x32xf32>
    %175 = arith.mulf %171, %174 : vector<2x32xf32>
    %176 = arith.addf %172, %175 : vector<2x32xf32>
    %177 = math.tanh %176 : vector<2x32xf32>
    %178 = vector.extract_strided_slice %45 {offsets = [0, 4], sizes = [2, 1], strides = [1, 1]} : vector<2x8xf32> to vector<2x1xf32>
    %179 = vector.broadcast %178 : vector<2x1xf32> to vector<2x32xf32>
    %180 = arith.mulf %179, %177 : vector<2x32xf32>
    %cst_32 = arith.constant 1.000000e+00 : f32
    %181 = vector.broadcast %cst_32 : f32 to vector<2x1xf32>
    %182 = arith.subf %181, %178 : vector<2x1xf32>
    %183 = vector.broadcast %182 : vector<2x1xf32> to vector<2x32xf32>
    %184 = arith.mulf %183, %159 : vector<2x32xf32>
    %185 = arith.addf %180, %184 : vector<2x32xf32>
    %186 = arith.truncf %185 : vector<2x32xf32> to vector<2x32xbf16>
    %cst_33 = arith.constant dense<0.000000e+00> : vector<2x64xf32>
    %187 = tpu.matmul %186, %52, %cst_33 {dimension_numbers = #tpu.dot_dimension_numbers<[1], [0], [0], [1], [0, 0, 1, 1], [], []>} : vector<2x32xbf16>, vector<32x64xbf16>, vector<2x64xf32> -> vector<2x64xf32>
    %188 = vector.extract_strided_slice %51 {offsets = [0, 5, 0], sizes = [2, 1, 64], strides = [1, 1, 1]} : vector<2x8x64xf32> to vector<2x1x64xf32>
    %189 = vector.shape_cast %188 : vector<2x1x64xf32> to vector<2x64xf32>
    %190 = vector.extract_strided_slice %189 {offsets = [0, 0], sizes = [2, 32], strides = [1, 1]} : vector<2x64xf32> to vector<2x32xf32>
    %191 = vector.extract_strided_slice %187 {offsets = [0, 0], sizes = [2, 32], strides = [1, 1]} : vector<2x64xf32> to vector<2x32xf32>
    %192 = arith.addf %190, %191 : vector<2x32xf32>
    %193 = arith.negf %192 : vector<2x32xf32>
    %194 = math.exp %193 : vector<2x32xf32>
    %cst_34 = arith.constant 1.000000e+00 : f32
    %195 = vector.broadcast %cst_34 : f32 to vector<2x32xf32>
    %196 = arith.addf %195, %194 : vector<2x32xf32>
    %197 = arith.divf %195, %196 : vector<2x32xf32>
    %198 = vector.extract_strided_slice %189 {offsets = [0, 32], sizes = [2, 32], strides = [1, 1]} : vector<2x64xf32> to vector<2x32xf32>
    %199 = vector.extract_strided_slice %187 {offsets = [0, 32], sizes = [2, 32], strides = [1, 1]} : vector<2x64xf32> to vector<2x32xf32>
    %200 = arith.addf %199, %54 : vector<2x32xf32>
    %201 = arith.mulf %197, %200 : vector<2x32xf32>
    %202 = arith.addf %198, %201 : vector<2x32xf32>
    %203 = math.tanh %202 : vector<2x32xf32>
    %204 = vector.extract_strided_slice %45 {offsets = [0, 5], sizes = [2, 1], strides = [1, 1]} : vector<2x8xf32> to vector<2x1xf32>
    %205 = vector.broadcast %204 : vector<2x1xf32> to vector<2x32xf32>
    %206 = arith.mulf %205, %203 : vector<2x32xf32>
    %cst_35 = arith.constant 1.000000e+00 : f32
    %207 = vector.broadcast %cst_35 : f32 to vector<2x1xf32>
    %208 = arith.subf %207, %204 : vector<2x1xf32>
    %209 = vector.broadcast %208 : vector<2x1xf32> to vector<2x32xf32>
    %210 = arith.mulf %209, %185 : vector<2x32xf32>
    %211 = arith.addf %206, %210 : vector<2x32xf32>
    %212 = arith.truncf %211 : vector<2x32xf32> to vector<2x32xbf16>
    %cst_36 = arith.constant dense<0.000000e+00> : vector<2x64xf32>
    %213 = tpu.matmul %212, %52, %cst_36 {dimension_numbers = #tpu.dot_dimension_numbers<[1], [0], [0], [1], [0, 0, 1, 1], [], []>} : vector<2x32xbf16>, vector<32x64xbf16>, vector<2x64xf32> -> vector<2x64xf32>
    %214 = vector.extract_strided_slice %51 {offsets = [0, 6, 0], sizes = [2, 1, 64], strides = [1, 1, 1]} : vector<2x8x64xf32> to vector<2x1x64xf32>
    %215 = vector.shape_cast %214 : vector<2x1x64xf32> to vector<2x64xf32>
    %216 = vector.extract_strided_slice %215 {offsets = [0, 0], sizes = [2, 32], strides = [1, 1]} : vector<2x64xf32> to vector<2x32xf32>
    %217 = vector.extract_strided_slice %213 {offsets = [0, 0], sizes = [2, 32], strides = [1, 1]} : vector<2x64xf32> to vector<2x32xf32>
    %218 = arith.addf %216, %217 : vector<2x32xf32>
    %219 = arith.negf %218 : vector<2x32xf32>
    %220 = math.exp %219 : vector<2x32xf32>
    %cst_37 = arith.constant 1.000000e+00 : f32
    %221 = vector.broadcast %cst_37 : f32 to vector<2x32xf32>
    %222 = arith.addf %221, %220 : vector<2x32xf32>
    %223 = arith.divf %221, %222 : vector<2x32xf32>
    %224 = vector.extract_strided_slice %215 {offsets = [0, 32], sizes = [2, 32], strides = [1, 1]} : vector<2x64xf32> to vector<2x32xf32>
    %225 = vector.extract_strided_slice %213 {offsets = [0, 32], sizes = [2, 32], strides = [1, 1]} : vector<2x64xf32> to vector<2x32xf32>
    %226 = arith.addf %225, %54 : vector<2x32xf32>
    %227 = arith.mulf %223, %226 : vector<2x32xf32>
    %228 = arith.addf %224, %227 : vector<2x32xf32>
    %229 = math.tanh %228 : vector<2x32xf32>
    %230 = vector.extract_strided_slice %45 {offsets = [0, 6], sizes = [2, 1], strides = [1, 1]} : vector<2x8xf32> to vector<2x1xf32>
    %231 = vector.broadcast %230 : vector<2x1xf32> to vector<2x32xf32>
    %232 = arith.mulf %231, %229 : vector<2x32xf32>
    %cst_38 = arith.constant 1.000000e+00 : f32
    %233 = vector.broadcast %cst_38 : f32 to vector<2x1xf32>
    %234 = arith.subf %233, %230 : vector<2x1xf32>
    %235 = vector.broadcast %234 : vector<2x1xf32> to vector<2x32xf32>
    %236 = arith.mulf %235, %211 : vector<2x32xf32>
    %237 = arith.addf %232, %236 : vector<2x32xf32>
    %238 = arith.truncf %237 : vector<2x32xf32> to vector<2x32xbf16>
    %cst_39 = arith.constant dense<0.000000e+00> : vector<2x64xf32>
    %239 = tpu.matmul %238, %52, %cst_39 {dimension_numbers = #tpu.dot_dimension_numbers<[1], [0], [0], [1], [0, 0, 1, 1], [], []>} : vector<2x32xbf16>, vector<32x64xbf16>, vector<2x64xf32> -> vector<2x64xf32>
    %240 = vector.extract_strided_slice %51 {offsets = [0, 7, 0], sizes = [2, 1, 64], strides = [1, 1, 1]} : vector<2x8x64xf32> to vector<2x1x64xf32>
    %241 = vector.shape_cast %240 : vector<2x1x64xf32> to vector<2x64xf32>
    %242 = vector.extract_strided_slice %241 {offsets = [0, 0], sizes = [2, 32], strides = [1, 1]} : vector<2x64xf32> to vector<2x32xf32>
    %243 = vector.extract_strided_slice %239 {offsets = [0, 0], sizes = [2, 32], strides = [1, 1]} : vector<2x64xf32> to vector<2x32xf32>
    %244 = arith.addf %242, %243 : vector<2x32xf32>
    %245 = arith.negf %244 : vector<2x32xf32>
    %246 = math.exp %245 : vector<2x32xf32>
    %cst_40 = arith.constant 1.000000e+00 : f32
    %247 = vector.broadcast %cst_40 : f32 to vector<2x32xf32>
    %248 = arith.addf %247, %246 : vector<2x32xf32>
    %249 = arith.divf %247, %248 : vector<2x32xf32>
    %250 = vector.extract_strided_slice %241 {offsets = [0, 32], sizes = [2, 32], strides = [1, 1]} : vector<2x64xf32> to vector<2x32xf32>
    %251 = vector.extract_strided_slice %239 {offsets = [0, 32], sizes = [2, 32], strides = [1, 1]} : vector<2x64xf32> to vector<2x32xf32>
    %252 = arith.addf %251, %54 : vector<2x32xf32>
    %253 = arith.mulf %249, %252 : vector<2x32xf32>
    %254 = arith.addf %250, %253 : vector<2x32xf32>
    %255 = math.tanh %254 : vector<2x32xf32>
    %256 = vector.extract_strided_slice %45 {offsets = [0, 7], sizes = [2, 1], strides = [1, 1]} : vector<2x8xf32> to vector<2x1xf32>
    %257 = vector.broadcast %256 : vector<2x1xf32> to vector<2x32xf32>
    %258 = arith.mulf %257, %255 : vector<2x32xf32>
    %cst_41 = arith.constant 1.000000e+00 : f32
    %259 = vector.broadcast %cst_41 : f32 to vector<2x1xf32>
    %260 = arith.subf %259, %256 : vector<2x1xf32>
    %261 = vector.broadcast %260 : vector<2x1xf32> to vector<2x32xf32>
    %262 = arith.mulf %261, %237 : vector<2x32xf32>
    %263 = arith.addf %258, %262 : vector<2x32xf32>
    %264 = vector.extract_strided_slice %1 {offsets = [0, 32], sizes = [2, 64], strides = [1, 1]} : vector<2x128xf32> to vector<2x64xf32>
    %265 = tpu.concatenate %264, %263 in 1 : vector<2x64xf32>, vector<2x32xf32> -> vector<2x96xf32>
    %266 = arith.truncf %265 : vector<2x96xf32> to vector<2x96xbf16>
    %c0_42 = arith.constant 0 : index
    %c0_43 = arith.constant 0 : index
    %267 = vector.load %arg5[%c0_42, %c0_43] : memref<96x32xbf16, #tpu.memory_space<vmem>>, vector<96x32xbf16>
    %cst_44 = arith.constant dense<0.000000e+00> : vector<2x32xf32>
    %268 = tpu.matmul %266, %267, %cst_44 {dimension_numbers = #tpu.dot_dimension_numbers<[1], [0], [0], [1], [0, 0, 1, 1], [], []>} : vector<2x96xbf16>, vector<96x32xbf16>, vector<2x32xf32> -> vector<2x32xf32>
    %269 = vector.broadcast %7 : vector<1x32xf32> to vector<2x32xf32>
    %270 = arith.addf %268, %269 : vector<2x32xf32>
    %cst_45 = arith.constant 0.000000e+00 : f32
    %271 = vector.broadcast %cst_45 : f32 to vector<2x32xf32>
    %272 = arith.maximumf %270, %271 : vector<2x32xf32>
    %c0_46 = arith.constant 0 : index
    %c0_47 = arith.constant 0 : index
    %273 = vector.load %arg7[%c0_46, %c0_47] : memref<2x32xf32, #tpu.memory_space<vmem>>, vector<2x32xf32>
    tpu.vector_store %arg7[%c0_46, %c0_47], %272 {strides = array<i32>} : memref<2x32xf32, #tpu.memory_space<vmem>>, vector<2x32xf32>,
    return
  }
}

</mosaic_0001>

<llo_original>
// kernel: tpu_custom_call.1
$region0: #{tpu_custom_call.1}
  #allocation0 [shape = 'u32[]', space=smem, size = 0x4, offset = 0x4, fixed_abs, tag = 'smem constant byte address 0x4 - core index']
  #allocation1 [shape = 'u32[144,128]{1,0:T(1,128)}', space=vmem, size = 0x12000, scoped, tag = 'internal scratch']
  %s0 = inlined_call_operand.vmem [shape: f32[2,8,32], index: 0, kind: input, shape index: {}]
  %s1 = inlined_call_operand.vmem [shape: f32[2,128], index: 1, kind: input, shape index: {}]
  %s2 = inlined_call_operand.vmem [shape: bf16[128,32], index: 2, kind: input, shape index: {}]
  %s3 = inlined_call_operand.vmem [shape: bf16[32,64], index: 3, kind: input, shape index: {}]
  %s4 = inlined_call_operand.vmem [shape: bf16[32,64], index: 4, kind: input, shape index: {}]
  %s5 = inlined_call_operand.vmem [shape: bf16[96,32], index: 5, kind: input, shape index: {}]
  %s6 = inlined_call_operand.vmem [shape: f32[8,64], index: 6, kind: input, shape index: {}]
  %s7 = inlined_call_operand.hbm [shape: f32[2,32], index: 7, kind: output, shape index: {}]
  %s8 = sld [smem:[#allocation0]]
  $region38: #{tpu_custom_call.1} parent=0
    _
  %s10 = ssub.s32 1, %s8
  %s11 = scalar_select 0, %s10, %s8
  $region1: #{tpu_custom_call.1} parent=0
    #allocation2 [shape = 'u8[1024]{0}', space=vmem, size = 0x400, scoped, tag = 'output window, operand 0, single buffered']
    #allocation3 [shape = 's32[1]{0}', space=sflag, size = 0x4, scoped, tag = 'scoped memory for tpu_custom_call.1']
    %12 = vsyncpa [#allocation3], 0
    // Predicated region
    $region2: #{tpu_custom_call.1} parent=1 // pred_check
      _
    $region3: #{tpu_custom_call.1} parent=1 // pred_check_branch
      %14 = sbr.rel (0) target = $region5
    $region4: #{tpu_custom_call.1} parent=1 // pred_region
      _
    $region5: #{tpu_custom_call.1} parent=1 // pred_fallthru
      _
    // Predicated region
    $region6: #{tpu_custom_call.1} parent=1 // pred_check
      _
    $region7: #{tpu_custom_call.1} parent=1 // pred_check_branch
      %16 = sbr.rel (0) target = $region9
    $region8: #{tpu_custom_call.1} parent=1 // pred_region
      _
    $region9: #{tpu_custom_call.1} parent=1 // pred_fallthru
      _
    // Predicated region
    $region10: #{tpu_custom_call.1} parent=1 // pred_check
      _
    $region11: #{tpu_custom_call.1} parent=1 // pred_check_branch
      %18 = sbr.rel (0) target = $region13
    $region12: #{tpu_custom_call.1} parent=1 // pred_region
      _
    $region13: #{tpu_custom_call.1} parent=1 // pred_fallthru
      _
    // Predicated region
    $region14: #{tpu_custom_call.1} parent=1 // pred_check
      _
    $region15: #{tpu_custom_call.1} parent=1 // pred_check_branch
      %20 = sbr.rel (0) target = $region17
    $region16: #{tpu_custom_call.1} parent=1 // pred_region
      _
    $region17: #{tpu_custom_call.1} parent=1 // pred_fallthru
      _
    // Predicated region
    $region18: #{tpu_custom_call.1} parent=1 // pred_check
      _
    $region19: #{tpu_custom_call.1} parent=1 // pred_check_branch
      %22 = sbr.rel (0) target = $region21
    $region20: #{tpu_custom_call.1} parent=1 // pred_region
      _
    $region21: #{tpu_custom_call.1} parent=1 // pred_fallthru
      _
    // Predicated region
    $region22: #{tpu_custom_call.1} parent=1 // pred_check
      _
    $region23: #{tpu_custom_call.1} parent=1 // pred_check_branch
      %24 = sbr.rel (0) target = $region25
    $region24: #{tpu_custom_call.1} parent=1 // pred_region
      _
    $region25: #{tpu_custom_call.1} parent=1 // pred_fallthru
      _
    // Predicated region
    $region26: #{tpu_custom_call.1} parent=1 // pred_check
      _
    $region27: #{tpu_custom_call.1} parent=1 // pred_check_branch
      %26 = sbr.rel (0) target = $region29
    $region28: #{tpu_custom_call.1} parent=1 // pred_region
      _
    $region29: #{tpu_custom_call.1} parent=1 // pred_fallthru
      _
    %v28 = vld [vmem:[%s0] sm:$0xff]
    %v29 = vld [vmem:[%s0 + $0x8] sm:$0xff]
    %v30 = vld [vmem:[%s1] sm:$0x3]
    %v31 = vld [vmem:[%s6] sm:$0xff]
    %34 = vrot.lane.b32.xlu0 %v28, 32
    %v35 = vpop.permute.xlu0 %34
    %36 = vrot.lane.b32.xlu0 %v29, 32
    %v37 = vpop.permute.xlu0 %36
    %40 = vrot.lane.b32.xlu0 %v28, 64
    %v41 = vpop.permute.xlu0 %40
    %42 = vrot.lane.b32.xlu0 %v29, 64
    %v43 = vpop.permute.xlu0 %42
    %46 = vrot.lane.b32.xlu0 %v28, 96
    %v47 = vpop.permute.xlu0 %46
    %48 = vrot.lane.b32.xlu0 %v29, 96
    %v49 = vpop.permute.xlu0 %48
    %vm52 = vcmask 261120
    %v53 = vsel %vm52, %v28, %v35
    %v54 = vsel %vm52, %v29, %v37
    %vm55 = vcmask 523264
    %v56 = vsel %vm55, %v53, %v41
    %v57 = vsel %vm55, %v54, %v43
    %vm58 = vcmask 785408
    %v59 = vsel %vm58, %v56, %v47
    %v60 = vsel %vm58, %v57, %v49
    %v63 = vunpack.c.l.s4 1966171168
    %v64 = vunpack.c.0.s8 %v63
    %v65 = vlaneseq
    %v66 = vshrl.u32 %v65, 7
    %v67 = vsub.s32 %v64, %v66
    %v68 = vrot.slane %v30, %v67
    %v69 = vcombine.high %v68, %v68
    %v71 = vunpack.c.l.s4 1966171168
    %v72 = vunpack.c.0.s8 %v71
    %v73 = vlaneseq
    %v74 = vshrl.u32 %v73, 7
    %v75 = vsub.s32 %v72, %v74
    %v76 = vrot.slane %v68, %v75
    %v78 = vunpack.c.l.s4 1966171168
    %v79 = vunpack.c.0.s8 %v78
    %v80 = vlaneseq
    %v81 = vshrl.u32 %v80, 7
    %v82 = vsub.s32 %v79, %v81
    %v83 = vrot.slane %v69, %v82
    %v84 = vlaneseq
    %v85 = vshrl.u32 %v84, 7
    %v86 = vsub.s32 0, %v85
    %v87 = vrot.slane %v76, %v86
    %v88 = vlaneseq
    %v89 = vshrl.u32 %v88, 7
    %v90 = vsub.s32 0, %v89
    %v91 = vrot.slane %v83, %v90
    %v94 = vmul.f32 %v59, %v87
    %v95 = vmul.f32 %v60, %v91
    %v96 = vsub.f32 %v59, %v87
    %v97 = vsub.f32 %v60, %v91
    %v98 = vand.u32 2147483647, %v96
    %v99 = vand.u32 2147483647, %v97
    %v100 = vlaneseq
    %v101 = vand.u32 %v100, 127
    %vm102 = vcmp.lt.s32.totalorder %v101, 64
    %v103 = vsel %vm102, %v94, %v98
    %v104 = vsel %vm102, %v95, %v99
    %v105 = vpack.c.bf16 %v104, %v103
    %v106 = vld [vmem:[%s2] sm:$0xf]
    %v107 = vld [vmem:[%s2 + $0x4] sm:$0xf]
    %v108 = vld [vmem:[%s2 + $0x8] sm:$0xf]
    %v109 = vld [vmem:[%s2 + $0xc] sm:$0xf]
    %v110 = vld [vmem:[%s2 + $0x10] sm:$0xf]
    %v111 = vld [vmem:[%s2 + $0x14] sm:$0xf]
    %v112 = vld [vmem:[%s2 + $0x18] sm:$0xf]
    %v113 = vld [vmem:[%s2 + $0x1c] sm:$0xf]
    %v114 = vld [vmem:[%s2 + $0x20] sm:$0xf]
    %v115 = vld [vmem:[%s2 + $0x24] sm:$0xf]
    %v116 = vld [vmem:[%s2 + $0x28] sm:$0xf]
    %v117 = vld [vmem:[%s2 + $0x2c] sm:$0xf]
    %v118 = vld [vmem:[%s2 + $0x30] sm:$0xf]
    %v119 = vld [vmem:[%s2 + $0x34] sm:$0xf]
    %v120 = vld [vmem:[%s2 + $0x38] sm:$0xf]
    %v121 = vld [vmem:[%s2 + $0x3c] sm:$0xf]
    %v122 = vlaneseq
    %v123 = vshrl.u32 %v122, 7
    %v124 = vsub.s32 0, %v123
    %v125 = vrot.slane %v31, %v124
    %v142 = vunpack.c.l.b16 %v106
    %v143 = vunpack.c.l.b16 %v107
    %v144 = vunpack.c.l.b16 %v108
    %v145 = vunpack.c.l.b16 %v109
    %v146 = vunpack.c.l.b16 %v110
    %v147 = vunpack.c.l.b16 %v111
    %v148 = vunpack.c.l.b16 %v112
    %v149 = vunpack.c.l.b16 %v113
    %v150 = vunpack.c.l.b16 %v114
    %v151 = vunpack.c.l.b16 %v115
    %v152 = vunpack.c.l.b16 %v116
    %v153 = vunpack.c.l.b16 %v117
    %v154 = vunpack.c.l.b16 %v118
    %v155 = vunpack.c.l.b16 %v119
    %v156 = vunpack.c.l.b16 %v120
    %v157 = vunpack.c.l.b16 %v121
    %v158 = vpack.c.b16 %v143, %v142
    %v159 = vpack.c.b16 %v145, %v144
    %v160 = vpack.c.b16 %v147, %v146
    %v161 = vpack.c.b16 %v149, %v148
    %v162 = vpack.c.b16 %v151, %v150
    %v163 = vpack.c.b16 %v153, %v152
    %v164 = vpack.c.b16 %v155, %v154
    %v165 = vpack.c.b16 %v157, %v156
    %174 = vmatprep.subr.bf16.mxu0 0
    %175 = vmatpush1.bf16.msra.mxu0 %v165
    %176 = vmatprep.subr.bf16.mxu0 0
    %177 = vmatpush1.bf16.msra.mxu0 %v164
    %178 = vmatprep.subr.bf16.mxu0 0
    %179 = vmatpush1.bf16.msra.mxu0 %v163
    %180 = vmatprep.subr.bf16.mxu0 0
    %181 = vmatpush1.bf16.msra.mxu0 %v162
    %182 = vmatprep.subr.bf16.mxu0 0
    %183 = vmatpush1.bf16.msra.mxu0 %v161
    %184 = vmatprep.subr.bf16.mxu0 0
    %185 = vmatpush1.bf16.msra.mxu0 %v160
    %186 = vmatprep.subr.bf16.mxu0 0
    %187 = vmatpush1.bf16.msra.mxu0 %v159
    %188 = vmatprep.subr.bf16.mxu0 0
    %189 = vmatpush1.bf16.msra.mxu0 %v158
    %190 = vmatprep.subr.bf16.mxu0 0
    %191 = vmatpush2.bf16.msra.mxu0 0
    %192 = vmatprep.subr.bf16.mxu0 0
    %193 = vmatpush2.bf16.msra.mxu0 0
    %194 = vmatprep.subr.bf16.mxu0 0
    %195 = vmatpush2.bf16.msra.mxu0 0
    %196 = vmatprep.subr.bf16.mxu0 0
    %197 = vmatpush2.bf16.msra.mxu0 0
    %198 = vmatprep.subr.bf16.mxu0 0
    %199 = vmatpush2.bf16.msra.mxu0 0
    %200 = vmatprep.subr.bf16.mxu0 0
    %201 = vmatpush2.bf16.msra.mxu0 0
    %202 = vmatprep.subr.bf16.mxu0 0
    %203 = vmatpush2.bf16.msra.mxu0 0
    %204 = vmatprep.subr.bf16.mxu0 0
    %205 = vmatpush2.bf16.msra.mxu0 0
    %206 = vmatprep.mubr.bf16.mxu0 0
    %207 = vmatmul.mubr.bf16.gmra.mxu0 %v105
    %v208 = vpop.f32.mrf.mxu0
    %v209 = vadd.f32 %v125, %v208
    %v210 = vpop.f32.mrf.mxu0
    %v211 = vpop.f32.mrf.mxu0
    %v212 = vadd.f32 %v125, %v211
    %v213 = vpop.f32.mrf.mxu0
    %214 = vdwg.mxu0
    %v215 = vtanh.pop %v209
    %v216 = vtanh.pop %v212
    %v217 = vlaneseq
    %v218 = vshrl.u32 %v217, 7
    %v219 = vsub.s32 1, %v218
    %v220 = vrot.slane %v31, %v219
    %v221 = vmul.f32 %v215, %v220
    %v222 = vmul.f32 %v216, %v220
    %v223 = vsel %vm52, %v221, 0.0
    %224 = vadd.xlane.f32.xlu0 %v223
    %v225 = vpop.xlane.xlu0 %224
    %v226 = vsel %vm52, %v222, 0.0
    %227 = vadd.xlane.f32.xlu0 %v226
    %v228 = vpop.xlane.xlu0 %227
    %v231 = vlaneseq
    %v232 = vshrl.u32 %v231, 7
    %v233 = vsub.s32 %v101, %v232
    %v234 = vrot.slane %v225, %v233
    %v235 = vlaneseq
    %v236 = vshrl.u32 %v235, 7
    %v237 = vsub.s32 %v101, %v236
    %v238 = vrot.slane %v228, %v237
    %vm239 = vcmask 1041409
    %v240 = vsel %vm239, %v238, %v234
    %vm242 = vcmask 58368
    %v243 = vsel %vm242, %v240, -inf
    %244 = vmax.xlane.f32.xlu0 %v243
    %v245 = vpop.xlane.xlu0 %244
    %v247 = vlaneseq
    %v248 = vshrl.u32 %v247, 7
    %v249 = vsub.s32 0, %v248
    %v250 = vrot.slane %v245, %v249
    %v251 = vlaneseq
    %v252 = vshrl.u32 %v251, 7
    %v253 = vsub.s32 1, %v252
    %v254 = vrot.slane %v245, %v253
    %v257 = vsub.f32 %v225, %v250
    %v258 = vsub.f32 %v228, %v254
    %v259 = vmul.f32 %v257, 1.442695
    %v260 = vpow.pop %v259
    %v261 = vmul.f32 %v258, 1.442695
    %v262 = vpow.pop %v261
    %265 = vset.pattern.permute.xlu0 0
    %266 = vperm.xlu0 %265, %v260
    %v267 = vpop.permute.xlu0 %266
    %268 = vset.pattern.permute.xlu0 0
    %269 = vperm.xlu0 %268, %v262
    %v270 = vpop.permute.xlu0 %269
    %v271 = vlaneseq
    %v272 = vshrl.u32 %v271, 7
    %v273 = vsub.s32 %v101, %v272
    %v274 = vrot.slane %v267, %v273
    %v275 = vlaneseq
    %v276 = vshrl.u32 %v275, 7
    %v277 = vsub.s32 %v101, %v276
    %v278 = vrot.slane %v270, %v277
    %v279 = vsel %vm239, %v278, %v274
    %v281 = vsel %vm242, %v279, 0.0
    %282 = vadd.xlane.f32.xlu0 %v281
    %v283 = vpop.xlane.xlu0 %282
    %v284 = vrcp.pop %v283
    %v285 = vmul.f32 %v283, %v284
    %v286 = vsub.f32 2.0, %v285
    %v287 = vmul.f32 %v284, %v286
    %v289 = vlaneseq
    %v290 = vshrl.u32 %v289, 7
    %v291 = vsub.s32 0, %v290
    %v292 = vrot.slane %v287, %v291
    %v293 = vlaneseq
    %v294 = vshrl.u32 %v293, 7
    %v295 = vsub.s32 1, %v294
    %v296 = vrot.slane %v287, %v295
    %v299 = vmul.f32 %v260, %v292
    %v300 = vmul.f32 %v262, %v296
    %v301 = vpack.c.bf16 %v29, %v28
    %v302 = vld [vmem:[%s3] sm:$0xf]
    %v303 = vld [vmem:[%s3 + $0x4] sm:$0xf]
    %v304 = vld [vmem:[%s3 + $0x8] sm:$0xf]
    %v305 = vld [vmem:[%s3 + $0xc] sm:$0xf]
    %v306 = vlaneseq
    %v307 = vshrl.u32 %v306, 7
    %v308 = vsub.s32 2, %v307
    %v309 = vrot.slane %v31, %v308
    %v314 = vunpack.c.l.b16 %v302
    %v315 = vunpack.c.l.b16 %v303
    %v316 = vunpack.c.l.b16 %v304
    %v317 = vunpack.c.l.b16 %v305
    %v318 = vpack.c.b16 %v315, %v314
    %v319 = vpack.c.b16 %v317, %v316
    %v323 = vsel %vm52, %v301, 0
    %325 = vmatprep.subr.bf16.mxu0 0
    %326 = vmatpush1.bf16.msra.mxu0 0
    %327 = vmatprep.subr.bf16.mxu0 0
    %328 = vmatpush1.bf16.msra.mxu0 0
    %329 = vmatprep.subr.bf16.mxu0 0
    %330 = vmatpush1.bf16.msra.mxu0 0
    %331 = vmatprep.subr.bf16.mxu0 0
    %332 = vmatpush1.bf16.msra.mxu0 0
    %333 = vmatprep.subr.bf16.mxu0 0
    %334 = vmatpush1.bf16.msra.mxu0 0
    %335 = vmatprep.subr.bf16.mxu0 0
    %336 = vmatpush1.bf16.msra.mxu0 0
    %337 = vmatprep.subr.bf16.mxu0 0
    %338 = vmatpush1.bf16.msra.mxu0 %v319
    %339 = vmatprep.subr.bf16.mxu0 0
    %340 = vmatpush1.bf16.msra.mxu0 %v318
    %341 = vmatprep.subr.bf16.mxu0 0
    %342 = vmatpush2.bf16.msra.mxu0 0
    %343 = vmatprep.subr.bf16.mxu0 0
    %344 = vmatpush2.bf16.msra.mxu0 0
    %345 = vmatprep.subr.bf16.mxu0 0
    %346 = vmatpush2.bf16.msra.mxu0 0
    %347 = vmatprep.subr.bf16.mxu0 0
    %348 = vmatpush2.bf16.msra.mxu0 0
    %349 = vmatprep.subr.bf16.mxu0 0
    %350 = vmatpush2.bf16.msra.mxu0 0
    %351 = vmatprep.subr.bf16.mxu0 0
    %352 = vmatpush2.bf16.msra.mxu0 0
    %353 = vmatprep.subr.bf16.mxu0 0
    %354 = vmatpush2.bf16.msra.mxu0 0
    %355 = vmatprep.subr.bf16.mxu0 0
    %356 = vmatpush2.bf16.msra.mxu0 0
    %357 = vmatprep.mubr.bf16.mxu0 0
    %358 = vmatmul.mubr.bf16.gmra.mxu0 %v323
    %v359 = vpop.f32.mrf.mxu0
    %v360 = vadd.f32 %v309, %v359
    %v361 = vpop.f32.mrf.mxu0
    %v362 = vpop.f32.mrf.mxu0
    %v363 = vadd.f32 %v309, %v362
    %v364 = vpop.f32.mrf.mxu0
    %365 = vdwg.mxu0
    %v366 = vld [vmem:[%s4] sm:$0xf]
    %v367 = vld [vmem:[%s4 + $0x4] sm:$0xf]
    %v368 = vld [vmem:[%s4 + $0x8] sm:$0xf]
    %v369 = vld [vmem:[%s4 + $0xc] sm:$0xf]
    %v370 = vlaneseq
    %v371 = vshrl.u32 %v370, 7
    %v372 = vsub.s32 3, %v371
    %v373 = vrot.slane %v31, %v372
    %v378 = vunpack.c.l.b16 %v366
    %v379 = vunpack.c.l.b16 %v367
    %v380 = vunpack.c.l.b16 %v368
    %v381 = vunpack.c.l.b16 %v369
    %v382 = vpack.c.b16 %v379, %v378
    %v383 = vpack.c.b16 %v381, %v380
    %v387 = vsel %vm52, 0, 0
    %389 = vmatprep.subr.bf16.mxu0 0
    %390 = vmatpush1.bf16.msra.mxu0 0
    %391 = vmatprep.subr.bf16.mxu0 0
    %392 = vmatpush1.bf16.msra.mxu0 0
    %393 = vmatprep.subr.bf16.mxu0 0
    %394 = vmatpush1.bf16.msra.mxu0 0
    %395 = vmatprep.subr.bf16.mxu0 0
    %396 = vmatpush1.bf16.msra.mxu0 0
    %397 = vmatprep.subr.bf16.mxu0 0
    %398 = vmatpush1.bf16.msra.mxu0 0
    %399 = vmatprep.subr.bf16.mxu0 0
    %400 = vmatpush1.bf16.msra.mxu0 0
    %401 = vmatprep.subr.bf16.mxu0 0
    %402 = vmatpush1.bf16.msra.mxu0 %v383
    %403 = vmatprep.subr.bf16.mxu0 0
    %404 = vmatpush1.bf16.msra.mxu0 %v382
    %405 = vmatprep.subr.bf16.mxu0 0
    %406 = vmatpush2.bf16.msra.mxu0 0
    %407 = vmatprep.subr.bf16.mxu0 0
    %408 = vmatpush2.bf16.msra.mxu0 0
    %409 = vmatprep.subr.bf16.mxu0 0
    %410 = vmatpush2.bf16.msra.mxu0 0
    %411 = vmatprep.subr.bf16.mxu0 0
    %412 = vmatpush2.bf16.msra.mxu0 0
    %413 = vmatprep.subr.bf16.mxu0 0
    %414 = vmatpush2.bf16.msra.mxu0 0
    %415 = vmatprep.subr.bf16.mxu0 0
    %416 = vmatpush2.bf16.msra.mxu0 0
    %417 = vmatprep.subr.bf16.mxu0 0
    %418 = vmatpush2.bf16.msra.mxu0 0
    %419 = vmatprep.subr.bf16.mxu0 0
    %420 = vmatpush2.bf16.msra.mxu0 0
    %421 = vmatprep.mubr.bf16.mxu0 0
    %422 = vmatmul.mubr.bf16.gmra.mxu0 %v387
    %v423 = vpop.f32.mrf.mxu0
    %v424 = vadd.f32 0.0, %v423
    %v425 = vpop.f32.mrf.mxu0
    %v426 = vpop.f32.mrf.mxu0
    %v427 = vpop.f32.mrf.mxu0
    %428 = vdwg.mxu0
    %v430 = vrot.slane %v424, 1
    %v433 = vadd.f32 %v360, %v424
    %v434 = vadd.f32 %v363, %v430
    %v435 = vxor.u32 %v433, 2147483648
    %v436 = vxor.u32 %v434, 2147483648
    %v437 = vmul.f32 %v435, 1.442695
    %v438 = vpow.pop %v437
    %v439 = vmul.f32 %v436, 1.442695
    %v440 = vpow.pop %v439
    %v441 = vadd.f32 %v438, 1.0
    %v442 = vadd.f32 %v440, 1.0
    %v443 = vrcp.pop %v441
    %v444 = vmul.f32 1.0, %v443
    %v445 = vrcp.pop %v442
    %v446 = vmul.f32 1.0, %v445
    %448 = vrot.lane.b32.xlu0 %v373, 32
    %v449 = vpop.permute.xlu0 %448
    %v451 = vadd.f32 %v424, %v449
    %v453 = vrot.slane %v451, 1
    %454 = vrot.lane.b32.xlu0 %v451, 96
    %v455 = vpop.permute.xlu0 %454
    %456 = vrot.lane.b32.xlu0 %v453, 96
    %v457 = vpop.permute.xlu0 %456
    %v460 = vmul.f32 %v444, %v455
    %v461 = vmul.f32 %v446, %v457
    %464 = vrot.lane.b32.xlu0 %v460, 32
    %v465 = vpop.permute.xlu0 %464
    %466 = vrot.lane.b32.xlu0 %v461, 32
    %v467 = vpop.permute.xlu0 %466
    %v470 = vadd.f32 %v360, %v465
    %v471 = vadd.f32 %v363, %v467
    %v472 = vtanh.pop %v470
    %v473 = vtanh.pop %v471
    %v474 = vlaneseq
    %v475 = vshrl.u32 %v474, 7
    %v476 = vsub.s32 0, %v475
    %v477 = vrot.slane %v299, %v476
    %v478 = vlaneseq
    %v479 = vshrl.u32 %v478, 7
    %v480 = vsub.s32 0, %v479
    %v481 = vrot.slane %v300, %v480
    %v484 = vlaneseq
    %v485 = vshrl.u32 %v484, 7
    %v486 = vsub.s32 0, %v485
    %v487 = vrot.slane %v472, %v486
    %s489 = sor.u32 256, 32
    %490 = vbcast.lane.b32.xlu0 %v487, %s489
    %v491 = vpop.permute.xlu0 %490
    %s493 = sor.u32 256, 40
    %494 = vbcast.lane.b32.xlu0 %v487, %s493
    %v495 = vpop.permute.xlu0 %494
    %s497 = sor.u32 256, 48
    %498 = vbcast.lane.b32.xlu0 %v487, %s497
    %v499 = vpop.permute.xlu0 %498
    %s501 = sor.u32 256, 56
    %502 = vbcast.lane.b32.xlu0 %v487, %s501
    %v503 = vpop.permute.xlu0 %502
    %v504 = vlaneseq
    %v505 = vshrl.u32 %v504, 7
    %v506 = vsub.s32 0, %v505
    %v507 = vrot.slane %v473, %v506
    %s509 = sor.u32 256, 32
    %510 = vbcast.lane.b32.xlu0 %v507, %s509
    %v511 = vpop.permute.xlu0 %510
    %s513 = sor.u32 256, 40
    %514 = vbcast.lane.b32.xlu0 %v507, %s513
    %v515 = vpop.permute.xlu0 %514
    %s517 = sor.u32 256, 48
    %518 = vbcast.lane.b32.xlu0 %v507, %s517
    %v519 = vpop.permute.xlu0 %518
    %s521 = sor.u32 256, 56
    %522 = vbcast.lane.b32.xlu0 %v507, %s521
    %v523 = vpop.permute.xlu0 %522
    %v532 = vmul.f32 %v477, %v491
    %v533 = vmul.f32 %v477, %v495
    %v534 = vmul.f32 %v477, %v499
    %v535 = vmul.f32 %v477, %v503
    %v536 = vmul.f32 %v481, %v511
    %v537 = vmul.f32 %v481, %v515
    %v538 = vmul.f32 %v481, %v519
    %v539 = vmul.f32 %v481, %v523
    %v540 = vsub.f32 1.0, %v299
    %v541 = vsub.f32 1.0, %v300
    %v542 = vlaneseq
    %v543 = vshrl.u32 %v542, 7
    %v544 = vsub.s32 0, %v543
    %v545 = vrot.slane %v540, %v544
    %v546 = vlaneseq
    %v547 = vshrl.u32 %v546, 7
    %v548 = vsub.s32 0, %v547
    %v549 = vrot.slane %v541, %v548
    %v550 = vmul.f32 %v545, 0.0
    %v551 = vmul.f32 %v549, 0.0
    %v552 = vadd.f32 %v532, %v550
    %v553 = vadd.f32 %v533, %v550
    %v554 = vadd.f32 %v534, %v550
    %v555 = vadd.f32 %v535, %v550
    %v556 = vadd.f32 %v536, %v551
    %v557 = vadd.f32 %v537, %v551
    %v558 = vadd.f32 %v538, %v551
    %v559 = vadd.f32 %v539, %v551
    %v560 = vpack.c.bf16 %v553, %v552
    %v561 = vpack.c.bf16 %v555, %v554
    %v562 = vpack.c.bf16 %v557, %v556
    %v563 = vpack.c.bf16 %v559, %v558
    %v568 = vunpack.c.l.b16 %v560
    %v569 = vunpack.c.h.b16 %v560
    %v570 = vunpack.c.l.b16 %v561
    %v571 = vunpack.c.h.b16 %v561
    %v572 = vunpack.c.l.b16 %v562
    %v573 = vunpack.c.h.b16 %v562
    %v574 = vunpack.c.l.b16 %v563
    %v575 = vunpack.c.h.b16 %v563
    %576 = vset.pattern.permute.xlu0 0
    %577 = vperm.xlu0 %576, %v568
    %v578 = vpop.permute.xlu0 %577
    %579 = vset.pattern.permute.xlu0 0
    %580 = vperm.xlu0 %579, %v569
    %v581 = vpop.permute.xlu0 %580
    %582 = vset.pattern.permute.xlu0 0
    %583 = vperm.xlu0 %582, %v570
    %v584 = vpop.permute.xlu0 %583
    %585 = vset.pattern.permute.xlu0 0
    %586 = vperm.xlu0 %585, %v571
    %v587 = vpop.permute.xlu0 %586
    %588 = vset.pattern.permute.xlu0 0
    %589 = vperm.xlu0 %588, %v572
    %v590 = vpop.permute.xlu0 %589
    %591 = vset.pattern.permute.xlu0 0
    %592 = vperm.xlu0 %591, %v573
    %v593 = vpop.permute.xlu0 %592
    %594 = vset.pattern.permute.xlu0 0
    %595 = vperm.xlu0 %594, %v574
    %v596 = vpop.permute.xlu0 %595
    %597 = vset.pattern.permute.xlu0 0
    %598 = vperm.xlu0 %597, %v575
    %v599 = vpop.permute.xlu0 %598
    %v600 = vlaneseq
    %v601 = vshrl.u32 %v600, 7
    %v602 = vsub.s32 %v101, %v601
    %v603 = vrot.slane %v578, %v602
    %v604 = vadd.s32 %v101, 4294967288
    %v605 = vlaneseq
    %v606 = vshrl.u32 %v605, 7
    %v607 = vsub.s32 %v604, %v606
    %v608 = vrot.slane %v581, %v607
    %vm609 = vcmask 130112
    %v610 = vsel %vm609, %v608, %v603
    %v611 = vadd.s32 %v101, 4294967280
    %v612 = vlaneseq
    %v613 = vshrl.u32 %v612, 7
    %v614 = vsub.s32 %v611, %v613
    %v615 = vrot.slane %v584, %v614
    %vm616 = vcmask 195712
    %v617 = vsel %vm616, %v615, %v610
    %v618 = vadd.s32 %v101, 4294967272
    %v619 = vlaneseq
    %v620 = vshrl.u32 %v619, 7
    %v621 = vsub.s32 %v618, %v620
    %v622 = vrot.slane %v587, %v621
    %vm623 = vcmask 261312
    %v624 = vsel %vm623, %v622, %v617
    %v625 = vlaneseq
    %v626 = vshrl.u32 %v625, 7
    %v627 = vsub.s32 %v101, %v626
    %v628 = vrot.slane %v590, %v627
    %v629 = vlaneseq
    %v630 = vshrl.u32 %v629, 7
    %v631 = vsub.s32 %v604, %v630
    %v632 = vrot.slane %v593, %v631
    %v633 = vsel %vm609, %v632, %v628
    %v634 = vlaneseq
    %v635 = vshrl.u32 %v634, 7
    %v636 = vsub.s32 %v611, %v635
    %v637 = vrot.slane %v596, %v636
    %v638 = vsel %vm616, %v637, %v633
    %v639 = vlaneseq
    %v640 = vshrl.u32 %v639, 7
    %v641 = vsub.s32 %v618, %v640
    %v642 = vrot.slane %v599, %v641
    %v643 = vsel %vm623, %v642, %v638
    %v644 = vsel %vm239, %v643, %v624
    %v645 = vpack.c.b16 %v644, %v644
    %v647 = vsel %vm52, %v645, 0
    %649 = vmatprep.subr.bf16.mxu0 0
    %650 = vmatpush1.bf16.msra.mxu0 0
    %651 = vmatprep.subr.bf16.mxu0 0
    %652 = vmatpush1.bf16.msra.mxu0 0
    %653 = vmatprep.subr.bf16.mxu0 0
    %654 = vmatpush1.bf16.msra.mxu0 0
    %655 = vmatprep.subr.bf16.mxu0 0
    %656 = vmatpush1.bf16.msra.mxu0 0
    %657 = vmatprep.subr.bf16.mxu0 0
    %658 = vmatpush1.bf16.msra.mxu0 0
    %659 = vmatprep.subr.bf16.mxu0 0
    %660 = vmatpush1.bf16.msra.mxu0 0
    %661 = vmatprep.subr.bf16.mxu0 0
    %662 = vmatpush1.bf16.msra.mxu0 %v383
    %663 = vmatprep.subr.bf16.mxu0 0
    %664 = vmatpush1.bf16.msra.mxu0 %v382
    %665 = vmatprep.subr.bf16.mxu0 0
    %666 = vmatpush2.bf16.msra.mxu0 0
    %667 = vmatprep.subr.bf16.mxu0 0
    %668 = vmatpush2.bf16.msra.mxu0 0
    %669 = vmatprep.subr.bf16.mxu0 0
    %670 = vmatpush2.bf16.msra.mxu0 0
    %671 = vmatprep.subr.bf16.mxu0 0
    %672 = vmatpush2.bf16.msra.mxu0 0
    %673 = vmatprep.subr.bf16.mxu0 0
    %674 = vmatpush2.bf16.msra.mxu0 0
    %675 = vmatprep.subr.bf16.mxu0 0
    %676 = vmatpush2.bf16.msra.mxu0 0
    %677 = vmatprep.subr.bf16.mxu0 0
    %678 = vmatpush2.bf16.msra.mxu0 0
    %679 = vmatprep.subr.bf16.mxu0 0
    %680 = vmatpush2.bf16.msra.mxu0 0
    %681 = vmatprep.mubr.bf16.mxu0 0
    %682 = vmatmul.mubr.bf16.gmra.mxu0 %v647
    %v683 = vpop.f32.mrf.mxu0
    %v684 = vadd.f32 0.0, %v683
    %v685 = vpop.f32.mrf.mxu0
    %v686 = vpop.f32.mrf.mxu0
    %v687 = vpop.f32.mrf.mxu0
    %688 = vdwg.mxu0
    %v690 = vrot.slane %v684, 7
    %v693 = vadd.f32 %v360, %v690
    %v694 = vadd.f32 %v363, %v684
    %v695 = vxor.u32 %v693, 2147483648
    %v696 = vxor.u32 %v694, 2147483648
    %v697 = vmul.f32 %v695, 1.442695
    %v698 = vpow.pop %v697
    %v699 = vmul.f32 %v696, 1.442695
    %v700 = vpow.pop %v699
    %v701 = vadd.f32 %v698, 1.0
    %v702 = vadd.f32 %v700, 1.0
    %v703 = vrcp.pop %v701
    %v704 = vmul.f32 1.0, %v703
    %v705 = vrcp.pop %v702
    %v706 = vmul.f32 1.0, %v705
    %v707 = vadd.f32 %v684, %v449
    %v709 = vrot.slane %v707, 7
    %710 = vrot.lane.b32.xlu0 %v709, 96
    %v711 = vpop.permute.xlu0 %710
    %712 = vrot.lane.b32.xlu0 %v707, 96
    %v713 = vpop.permute.xlu0 %712
    %v716 = vmul.f32 %v704, %v711
    %v717 = vmul.f32 %v706, %v713
    %720 = vrot.lane.b32.xlu0 %v716, 32
    %v721 = vpop.permute.xlu0 %720
    %722 = vrot.lane.b32.xlu0 %v717, 32
    %v723 = vpop.permute.xlu0 %722
    %v726 = vadd.f32 %v360, %v721
    %v727 = vadd.f32 %v363, %v723
    %v728 = vtanh.pop %v726
    %v729 = vtanh.pop %v727
    %v730 = vlaneseq
    %v731 = vshrl.u32 %v730, 7
    %v732 = vsub.s32 1, %v731
    %v733 = vrot.slane %v299, %v732
    %v734 = vlaneseq
    %v735 = vshrl.u32 %v734, 7
    %v736 = vsub.s32 1, %v735
    %v737 = vrot.slane %v300, %v736
    %v740 = vlaneseq
    %v741 = vshrl.u32 %v740, 7
    %v742 = vsub.s32 1, %v741
    %v743 = vrot.slane %v728, %v742
    %s745 = sor.u32 256, 32
    %746 = vbcast.lane.b32.xlu0 %v743, %s745
    %v747 = vpop.permute.xlu0 %746
    %s749 = sor.u32 256, 40
    %750 = vbcast.lane.b32.xlu0 %v743, %s749
    %v751 = vpop.permute.xlu0 %750
    %s753 = sor.u32 256, 48
    %754 = vbcast.lane.b32.xlu0 %v743, %s753
    %v755 = vpop.permute.xlu0 %754
    %s757 = sor.u32 256, 56
    %758 = vbcast.lane.b32.xlu0 %v743, %s757
    %v759 = vpop.permute.xlu0 %758
    %v760 = vlaneseq
    %v761 = vshrl.u32 %v760, 7
    %v762 = vsub.s32 1, %v761
    %v763 = vrot.slane %v729, %v762
    %s765 = sor.u32 256, 32
    %766 = vbcast.lane.b32.xlu0 %v763, %s765
    %v767 = vpop.permute.xlu0 %766
    %s769 = sor.u32 256, 40
    %770 = vbcast.lane.b32.xlu0 %v763, %s769
    %v771 = vpop.permute.xlu0 %770
    %s773 = sor.u32 256, 48
    %774 = vbcast.lane.b32.xlu0 %v763, %s773
    %v775 = vpop.permute.xlu0 %774
    %s777 = sor.u32 256, 56
    %778 = vbcast.lane.b32.xlu0 %v763, %s777
    %v779 = vpop.permute.xlu0 %778
    %v788 = vmul.f32 %v733, %v747
    %v789 = vmul.f32 %v733, %v751
    %v790 = vmul.f32 %v733, %v755
    %v791 = vmul.f32 %v733, %v759
    %v792 = vmul.f32 %v737, %v767
    %v793 = vmul.f32 %v737, %v771
    %v794 = vmul.f32 %v737, %v775
    %v795 = vmul.f32 %v737, %v779
    %v796 = vlaneseq
    %v797 = vshrl.u32 %v796, 7
    %v798 = vsub.s32 1, %v797
    %v799 = vrot.slane %v540, %v798
    %v800 = vlaneseq
    %v801 = vshrl.u32 %v800, 7
    %v802 = vsub.s32 1, %v801
    %v803 = vrot.slane %v541, %v802
    %v804 = vmul.f32 %v799, %v552
    %v805 = vmul.f32 %v799, %v553
    %v806 = vmul.f32 %v799, %v554
    %v807 = vmul.f32 %v799, %v555
    %v808 = vmul.f32 %v803, %v556
    %v809 = vmul.f32 %v803, %v557
    %v810 = vmul.f32 %v803, %v558
    %v811 = vmul.f32 %v803, %v559
    %v812 = vadd.f32 %v788, %v804
    %v813 = vadd.f32 %v789, %v805
    %v814 = vadd.f32 %v790, %v806
    %v815 = vadd.f32 %v791, %v807
    %v816 = vadd.f32 %v792, %v808
    %v817 = vadd.f32 %v793, %v809
    %v818 = vadd.f32 %v794, %v810
    %v819 = vadd.f32 %v795, %v811
    %v820 = vpack.c.bf16 %v813, %v812
    %v821 = vpack.c.bf16 %v815, %v814
    %v822 = vpack.c.bf16 %v817, %v816
    %v823 = vpack.c.bf16 %v819, %v818
    %v828 = vunpack.c.l.b16 %v820
    %v829 = vunpack.c.h.b16 %v820
    %v830 = vunpack.c.l.b16 %v821
    %v831 = vunpack.c.h.b16 %v821
    %v832 = vunpack.c.l.b16 %v822
    %v833 = vunpack.c.h.b16 %v822
    %v834 = vunpack.c.l.b16 %v823
    %v835 = vunpack.c.h.b16 %v823
    %836 = vset.pattern.permute.xlu0 0
    %837 = vperm.xlu0 %836, %v828
    %v838 = vpop.permute.xlu0 %837
    %839 = vset.pattern.permute.xlu0 0
    %840 = vperm.xlu0 %839, %v829
    %v841 = vpop.permute.xlu0 %840
    %842 = vset.pattern.permute.xlu0 0
    %843 = vperm.xlu0 %842, %v830
    %v844 = vpop.permute.xlu0 %843
    %845 = vset.pattern.permute.xlu0 0
    %846 = vperm.xlu0 %845, %v831
    %v847 = vpop.permute.xlu0 %846
    %848 = vset.pattern.permute.xlu0 0
    %849 = vperm.xlu0 %848, %v832
    %v850 = vpop.permute.xlu0 %849
    %851 = vset.pattern.permute.xlu0 0
    %852 = vperm.xlu0 %851, %v833
    %v853 = vpop.permute.xlu0 %852
    %854 = vset.pattern.permute.xlu0 0
    %855 = vperm.xlu0 %854, %v834
    %v856 = vpop.permute.xlu0 %855
    %857 = vset.pattern.permute.xlu0 0
    %858 = vperm.xlu0 %857, %v835
    %v859 = vpop.permute.xlu0 %858
    %v860 = vlaneseq
    %v861 = vshrl.u32 %v860, 7
    %v862 = vsub.s32 %v101, %v861
    %v863 = vrot.slane %v838, %v862
    %v864 = vlaneseq
    %v865 = vshrl.u32 %v864, 7
    %v866 = vsub.s32 %v604, %v865
    %v867 = vrot.slane %v841, %v866
    %v868 = vsel %vm609, %v867, %v863
    %v869 = vlaneseq
    %v870 = vshrl.u32 %v869, 7
    %v871 = vsub.s32 %v611, %v870
    %v872 = vrot.slane %v844, %v871
    %v873 = vsel %vm616, %v872, %v868
    %v874 = vlaneseq
    %v875 = vshrl.u32 %v874, 7
    %v876 = vsub.s32 %v618, %v875
    %v877 = vrot.slane %v847, %v876
    %v878 = vsel %vm623, %v877, %v873
    %v879 = vlaneseq
    %v880 = vshrl.u32 %v879, 7
    %v881 = vsub.s32 %v101, %v880
    %v882 = vrot.slane %v850, %v881
    %v883 = vlaneseq
    %v884 = vshrl.u32 %v883, 7
    %v885 = vsub.s32 %v604, %v884
    %v886 = vrot.slane %v853, %v885
    %v887 = vsel %vm609, %v886, %v882
    %v888 = vlaneseq
    %v889 = vshrl.u32 %v888, 7
    %v890 = vsub.s32 %v611, %v889
    %v891 = vrot.slane %v856, %v890
    %v892 = vsel %vm616, %v891, %v887
    %v893 = vlaneseq
    %v894 = vshrl.u32 %v893, 7
    %v895 = vsub.s32 %v618, %v894
    %v896 = vrot.slane %v859, %v895
    %v897 = vsel %vm623, %v896, %v892
    %v898 = vsel %vm239, %v897, %v878
    %v899 = vpack.c.b16 %v898, %v898
    %v901 = vsel %vm52, %v899, 0
    %903 = vmatprep.subr.bf16.mxu0 0
    %904 = vmatpush1.bf16.msra.mxu0 0
    %905 = vmatprep.subr.bf16.mxu0 0
    %906 = vmatpush1.bf16.msra.mxu0 0
    %907 = vmatprep.subr.bf16.mxu0 0
    %908 = vmatpush1.bf16.msra.mxu0 0
    %909 = vmatprep.subr.bf16.mxu0 0
    %910 = vmatpush1.bf16.msra.mxu0 0
    %911 = vmatprep.subr.bf16.mxu0 0
    %912 = vmatpush1.bf16.msra.mxu0 0
    %913 = vmatprep.subr.bf16.mxu0 0
    %914 = vmatpush1.bf16.msra.mxu0 0
    %915 = vmatprep.subr.bf16.mxu0 0
    %916 = vmatpush1.bf16.msra.mxu0 %v383
    %917 = vmatprep.subr.bf16.mxu0 0
    %918 = vmatpush1.bf16.msra.mxu0 %v382
    %919 = vmatprep.subr.bf16.mxu0 0
    %920 = vmatpush2.bf16.msra.mxu0 0
    %921 = vmatprep.subr.bf16.mxu0 0
    %922 = vmatpush2.bf16.msra.mxu0 0
    %923 = vmatprep.subr.bf16.mxu0 0
    %924 = vmatpush2.bf16.msra.mxu0 0
    %925 = vmatprep.subr.bf16.mxu0 0
    %926 = vmatpush2.bf16.msra.mxu0 0
    %927 = vmatprep.subr.bf16.mxu0 0
    %928 = vmatpush2.bf16.msra.mxu0 0
    %929 = vmatprep.subr.bf16.mxu0 0
    %930 = vmatpush2.bf16.msra.mxu0 0
    %931 = vmatprep.subr.bf16.mxu0 0
    %932 = vmatpush2.bf16.msra.mxu0 0
    %933 = vmatprep.subr.bf16.mxu0 0
    %934 = vmatpush2.bf16.msra.mxu0 0
    %935 = vmatprep.mubr.bf16.mxu0 0
    %936 = vmatmul.mubr.bf16.gmra.mxu0 %v901
    %v937 = vpop.f32.mrf.mxu0
    %v938 = vadd.f32 0.0, %v937
    %v939 = vpop.f32.mrf.mxu0
    %v940 = vpop.f32.mrf.mxu0
    %v941 = vpop.f32.mrf.mxu0
    %942 = vdwg.mxu0
    %v944 = vrot.slane %v938, 6
    %v945 = vrot.slane %v938, 7
    %v948 = vadd.f32 %v360, %v944
    %v949 = vadd.f32 %v363, %v945
    %v950 = vxor.u32 %v948, 2147483648
    %v951 = vxor.u32 %v949, 2147483648
    %v952 = vmul.f32 %v950, 1.442695
    %v953 = vpow.pop %v952
    %v954 = vmul.f32 %v951, 1.442695
    %v955 = vpow.pop %v954
    %v956 = vadd.f32 %v953, 1.0
    %v957 = vadd.f32 %v955, 1.0
    %v958 = vrcp.pop %v956
    %v959 = vmul.f32 1.0, %v958
    %v960 = vrcp.pop %v957
    %v961 = vmul.f32 1.0, %v960
    %v962 = vadd.f32 %v938, %v449
    %v964 = vrot.slane %v962, 6
    %v965 = vrot.slane %v962, 7
    %966 = vrot.lane.b32.xlu0 %v964, 96
    %v967 = vpop.permute.xlu0 %966
    %968 = vrot.lane.b32.xlu0 %v965, 96
    %v969 = vpop.permute.xlu0 %968
    %v972 = vmul.f32 %v959, %v967
    %v973 = vmul.f32 %v961, %v969
    %976 = vrot.lane.b32.xlu0 %v972, 32
    %v977 = vpop.permute.xlu0 %976
    %978 = vrot.lane.b32.xlu0 %v973, 32
    %v979 = vpop.permute.xlu0 %978
    %v982 = vadd.f32 %v360, %v977
    %v983 = vadd.f32 %v363, %v979
    %v984 = vtanh.pop %v982
    %v985 = vtanh.pop %v983
    %v986 = vlaneseq
    %v987 = vshrl.u32 %v986, 7
    %v988 = vsub.s32 2, %v987
    %v989 = vrot.slane %v299, %v988
    %v990 = vlaneseq
    %v991 = vshrl.u32 %v990, 7
    %v992 = vsub.s32 2, %v991
    %v993 = vrot.slane %v300, %v992
    %v996 = vlaneseq
    %v997 = vshrl.u32 %v996, 7
    %v998 = vsub.s32 2, %v997
    %v999 = vrot.slane %v984, %v998
    %s1001 = sor.u32 256, 32
    %1002 = vbcast.lane.b32.xlu0 %v999, %s1001
    %v1003 = vpop.permute.xlu0 %1002
    %s1005 = sor.u32 256, 40
    %1006 = vbcast.lane.b32.xlu0 %v999, %s1005
    %v1007 = vpop.permute.xlu0 %1006
    %s1009 = sor.u32 256, 48
    %1010 = vbcast.lane.b32.xlu0 %v999, %s1009
    %v1011 = vpop.permute.xlu0 %1010
    %s1013 = sor.u32 256, 56
    %1014 = vbcast.lane.b32.xlu0 %v999, %s1013
    %v1015 = vpop.permute.xlu0 %1014
    %v1016 = vlaneseq
    %v1017 = vshrl.u32 %v1016, 7
    %v1018 = vsub.s32 2, %v1017
    %v1019 = vrot.slane %v985, %v1018
    %s1021 = sor.u32 256, 32
    %1022 = vbcast.lane.b32.xlu0 %v1019, %s1021
    %v1023 = vpop.permute.xlu0 %1022
    %s1025 = sor.u32 256, 40
    %1026 = vbcast.lane.b32.xlu0 %v1019, %s1025
    %v1027 = vpop.permute.xlu0 %1026
    %s1029 = sor.u32 256, 48
    %1030 = vbcast.lane.b32.xlu0 %v1019, %s1029
    %v1031 = vpop.permute.xlu0 %1030
    %s1033 = sor.u32 256, 56
    %1034 = vbcast.lane.b32.xlu0 %v1019, %s1033
    %v1035 = vpop.permute.xlu0 %1034
    %v1044 = vmul.f32 %v989, %v1003
    %v1045 = vmul.f32 %v989, %v1007
    %v1046 = vmul.f32 %v989, %v1011
    %v1047 = vmul.f32 %v989, %v1015
    %v1048 = vmul.f32 %v993, %v1023
    %v1049 = vmul.f32 %v993, %v1027
    %v1050 = vmul.f32 %v993, %v1031
    %v1051 = vmul.f32 %v993, %v1035
    %v1052 = vlaneseq
    %v1053 = vshrl.u32 %v1052, 7
    %v1054 = vsub.s32 2, %v1053
    %v1055 = vrot.slane %v540, %v1054
    %v1056 = vlaneseq
    %v1057 = vshrl.u32 %v1056, 7
    %v1058 = vsub.s32 2, %v1057
    %v1059 = vrot.slane %v541, %v1058
    %v1060 = vmul.f32 %v1055, %v812
    %v1061 = vmul.f32 %v1055, %v813
    %v1062 = vmul.f32 %v1055, %v814
    %v1063 = vmul.f32 %v1055, %v815
    %v1064 = vmul.f32 %v1059, %v816
    %v1065 = vmul.f32 %v1059, %v817
    %v1066 = vmul.f32 %v1059, %v818
    %v1067 = vmul.f32 %v1059, %v819
    %v1068 = vadd.f32 %v1044, %v1060
    %v1069 = vadd.f32 %v1045, %v1061
    %v1070 = vadd.f32 %v1046, %v1062
    %v1071 = vadd.f32 %v1047, %v1063
    %v1072 = vadd.f32 %v1048, %v1064
    %v1073 = vadd.f32 %v1049, %v1065
    %v1074 = vadd.f32 %v1050, %v1066
    %v1075 = vadd.f32 %v1051, %v1067
    %v1076 = vpack.c.bf16 %v1069, %v1068
    %v1077 = vpack.c.bf16 %v1071, %v1070
    %v1078 = vpack.c.bf16 %v1073, %v1072
    %v1079 = vpack.c.bf16 %v1075, %v1074
    %v1084 = vunpack.c.l.b16 %v1076
    %v1085 = vunpack.c.h.b16 %v1076
    %v1086 = vunpack.c.l.b16 %v1077
    %v1087 = vunpack.c.h.b16 %v1077
    %v1088 = vunpack.c.l.b16 %v1078
    %v1089 = vunpack.c.h.b16 %v1078
    %v1090 = vunpack.c.l.b16 %v1079
    %v1091 = vunpack.c.h.b16 %v1079
    %1092 = vset.pattern.permute.xlu0 0
    %1093 = vperm.xlu0 %1092, %v1084
    %v1094 = vpop.permute.xlu0 %1093
    %1095 = vset.pattern.permute.xlu0 0
    %1096 = vperm.xlu0 %1095, %v1085
    %v1097 = vpop.permute.xlu0 %1096
    %1098 = vset.pattern.permute.xlu0 0
    %1099 = vperm.xlu0 %1098, %v1086
    %v1100 = vpop.permute.xlu0 %1099
    %1101 = vset.pattern.permute.xlu0 0
    %1102 = vperm.xlu0 %1101, %v1087
    %v1103 = vpop.permute.xlu0 %1102
    %1104 = vset.pattern.permute.xlu0 0
    %1105 = vperm.xlu0 %1104, %v1088
    %v1106 = vpop.permute.xlu0 %1105
    %1107 = vset.pattern.permute.xlu0 0
    %1108 = vperm.xlu0 %1107, %v1089
    %v1109 = vpop.permute.xlu0 %1108
    %1110 = vset.pattern.permute.xlu0 0
    %1111 = vperm.xlu0 %1110, %v1090
    %v1112 = vpop.permute.xlu0 %1111
    %1113 = vset.pattern.permute.xlu0 0
    %1114 = vperm.xlu0 %1113, %v1091
    %v1115 = vpop.permute.xlu0 %1114
    %v1116 = vlaneseq
    %v1117 = vshrl.u32 %v1116, 7
    %v1118 = vsub.s32 %v101, %v1117
    %v1119 = vrot.slane %v1094, %v1118
    %v1120 = vlaneseq
    %v1121 = vshrl.u32 %v1120, 7
    %v1122 = vsub.s32 %v604, %v1121
    %v1123 = vrot.slane %v1097, %v1122
    %v1124 = vsel %vm609, %v1123, %v1119
    %v1125 = vlaneseq
    %v1126 = vshrl.u32 %v1125, 7
    %v1127 = vsub.s32 %v611, %v1126
    %v1128 = vrot.slane %v1100, %v1127
    %v1129 = vsel %vm616, %v1128, %v1124
    %v1130 = vlaneseq
    %v1131 = vshrl.u32 %v1130, 7
    %v1132 = vsub.s32 %v618, %v1131
    %v1133 = vrot.slane %v1103, %v1132
    %v1134 = vsel %vm623, %v1133, %v1129
    %v1135 = vlaneseq
    %v1136 = vshrl.u32 %v1135, 7
    %v1137 = vsub.s32 %v101, %v1136
    %v1138 = vrot.slane %v1106, %v1137
    %v1139 = vlaneseq
    %v1140 = vshrl.u32 %v1139, 7
    %v1141 = vsub.s32 %v604, %v1140
    %v1142 = vrot.slane %v1109, %v1141
    %v1143 = vsel %vm609, %v1142, %v1138
    %v1144 = vlaneseq
    %v1145 = vshrl.u32 %v1144, 7
    %v1146 = vsub.s32 %v611, %v1145
    %v1147 = vrot.slane %v1112, %v1146
    %v1148 = vsel %vm616, %v1147, %v1143
    %v1149 = vlaneseq
    %v1150 = vshrl.u32 %v1149, 7
    %v1151 = vsub.s32 %v618, %v1150
    %v1152 = vrot.slane %v1115, %v1151
    %v1153 = vsel %vm623, %v1152, %v1148
    %v1154 = vsel %vm239, %v1153, %v1134
    %v1155 = vpack.c.b16 %v1154, %v1154
    %v1157 = vsel %vm52, %v1155, 0
    %1159 = vmatprep.subr.bf16.mxu0 0
    %1160 = vmatpush1.bf16.msra.mxu0 0
    %1161 = vmatprep.subr.bf16.mxu0 0
    %1162 = vmatpush1.bf16.msra.mxu0 0
    %1163 = vmatprep.subr.bf16.mxu0 0
    %1164 = vmatpush1.bf16.msra.mxu0 0
    %1165 = vmatprep.subr.bf16.mxu0 0
    %1166 = vmatpush1.bf16.msra.mxu0 0
    %1167 = vmatprep.subr.bf16.mxu0 0
    %1168 = vmatpush1.bf16.msra.mxu0 0
    %1169 = vmatprep.subr.bf16.mxu0 0
    %1170 = vmatpush1.bf16.msra.mxu0 0
    %1171 = vmatprep.subr.bf16.mxu0 0
    %1172 = vmatpush1.bf16.msra.mxu0 %v383
    %1173 = vmatprep.subr.bf16.mxu0 0
    %1174 = vmatpush1.bf16.msra.mxu0 %v382
    %1175 = vmatprep.subr.bf16.mxu0 0
    %1176 = vmatpush2.bf16.msra.mxu0 0
    %1177 = vmatprep.subr.bf16.mxu0 0
    %1178 = vmatpush2.bf16.msra.mxu0 0
    %1179 = vmatprep.subr.bf16.mxu0 0
    %1180 = vmatpush2.bf16.msra.mxu0 0
    %1181 = vmatprep.subr.bf16.mxu0 0
    %1182 = vmatpush2.bf16.msra.mxu0 0
    %1183 = vmatprep.subr.bf16.mxu0 0
    %1184 = vmatpush2.bf16.msra.mxu0 0
    %1185 = vmatprep.subr.bf16.mxu0 0
    %1186 = vmatpush2.bf16.msra.mxu0 0
    %1187 = vmatprep.subr.bf16.mxu0 0
    %1188 = vmatpush2.bf16.msra.mxu0 0
    %1189 = vmatprep.subr.bf16.mxu0 0
    %1190 = vmatpush2.bf16.msra.mxu0 0
    %1191 = vmatprep.mubr.bf16.mxu0 0
    %1192 = vmatmul.mubr.bf16.gmra.mxu0 %v1157
    %v1193 = vpop.f32.mrf.mxu0
    %v1194 = vadd.f32 0.0, %v1193
    %v1195 = vpop.f32.mrf.mxu0
    %v1196 = vpop.f32.mrf.mxu0
    %v1197 = vpop.f32.mrf.mxu0
    %1198 = vdwg.mxu0
    %v1200 = vrot.slane %v1194, 5
    %v1201 = vrot.slane %v1194, 6
    %v1204 = vadd.f32 %v360, %v1200
    %v1205 = vadd.f32 %v363, %v1201
    %v1206 = vxor.u32 %v1204, 2147483648
    %v1207 = vxor.u32 %v1205, 2147483648
    %v1208 = vmul.f32 %v1206, 1.442695
    %v1209 = vpow.pop %v1208
    %v1210 = vmul.f32 %v1207, 1.442695
    %v1211 = vpow.pop %v1210
    %v1212 = vadd.f32 %v1209, 1.0
    %v1213 = vadd.f32 %v1211, 1.0
    %v1214 = vrcp.pop %v1212
    %v1215 = vmul.f32 1.0, %v1214
    %v1216 = vrcp.pop %v1213
    %v1217 = vmul.f32 1.0, %v1216
    %v1218 = vadd.f32 %v1194, %v449
    %v1220 = vrot.slane %v1218, 5
    %v1221 = vrot.slane %v1218, 6
    %1222 = vrot.lane.b32.xlu0 %v1220, 96
    %v1223 = vpop.permute.xlu0 %1222
    %1224 = vrot.lane.b32.xlu0 %v1221, 96
    %v1225 = vpop.permute.xlu0 %1224
    %v1228 = vmul.f32 %v1215, %v1223
    %v1229 = vmul.f32 %v1217, %v1225
    %1232 = vrot.lane.b32.xlu0 %v1228, 32
    %v1233 = vpop.permute.xlu0 %1232
    %1234 = vrot.lane.b32.xlu0 %v1229, 32
    %v1235 = vpop.permute.xlu0 %1234
    %v1238 = vadd.f32 %v360, %v1233
    %v1239 = vadd.f32 %v363, %v1235
    %v1240 = vtanh.pop %v1238
    %v1241 = vtanh.pop %v1239
    %v1242 = vlaneseq
    %v1243 = vshrl.u32 %v1242, 7
    %v1244 = vsub.s32 3, %v1243
    %v1245 = vrot.slane %v299, %v1244
    %v1246 = vlaneseq
    %v1247 = vshrl.u32 %v1246, 7
    %v1248 = vsub.s32 3, %v1247
    %v1249 = vrot.slane %v300, %v1248
    %v1252 = vlaneseq
    %v1253 = vshrl.u32 %v1252, 7
    %v1254 = vsub.s32 3, %v1253
    %v1255 = vrot.slane %v1240, %v1254
    %s1257 = sor.u32 256, 32
    %1258 = vbcast.lane.b32.xlu0 %v1255, %s1257
    %v1259 = vpop.permute.xlu0 %1258
    %s1261 = sor.u32 256, 40
    %1262 = vbcast.lane.b32.xlu0 %v1255, %s1261
    %v1263 = vpop.permute.xlu0 %1262
    %s1265 = sor.u32 256, 48
    %1266 = vbcast.lane.b32.xlu0 %v1255, %s1265
    %v1267 = vpop.permute.xlu0 %1266
    %s1269 = sor.u32 256, 56
    %1270 = vbcast.lane.b32.xlu0 %v1255, %s1269
    %v1271 = vpop.permute.xlu0 %1270
    %v1272 = vlaneseq
    %v1273 = vshrl.u32 %v1272, 7
    %v1274 = vsub.s32 3, %v1273
    %v1275 = vrot.slane %v1241, %v1274
    %s1277 = sor.u32 256, 32
    %1278 = vbcast.lane.b32.xlu0 %v1275, %s1277
    %v1279 = vpop.permute.xlu0 %1278
    %s1281 = sor.u32 256, 40
    %1282 = vbcast.lane.b32.xlu0 %v1275, %s1281
    %v1283 = vpop.permute.xlu0 %1282
    %s1285 = sor.u32 256, 48
    %1286 = vbcast.lane.b32.xlu0 %v1275, %s1285
    %v1287 = vpop.permute.xlu0 %1286
    %s1289 = sor.u32 256, 56
    %1290 = vbcast.lane.b32.xlu0 %v1275, %s1289
    %v1291 = vpop.permute.xlu0 %1290
    %v1300 = vmul.f32 %v1245, %v1259
    %v1301 = vmul.f32 %v1245, %v1263
    %v1302 = vmul.f32 %v1245, %v1267
    %v1303 = vmul.f32 %v1245, %v1271
    %v1304 = vmul.f32 %v1249, %v1279
    %v1305 = vmul.f32 %v1249, %v1283
    %v1306 = vmul.f32 %v1249, %v1287
    %v1307 = vmul.f32 %v1249, %v1291
    %v1308 = vlaneseq
    %v1309 = vshrl.u32 %v1308, 7
    %v1310 = vsub.s32 3, %v1309
    %v1311 = vrot.slane %v540, %v1310
    %v1312 = vlaneseq
    %v1313 = vshrl.u32 %v1312, 7
    %v1314 = vsub.s32 3, %v1313
    %v1315 = vrot.slane %v541, %v1314
    %v1316 = vmul.f32 %v1311, %v1068
    %v1317 = vmul.f32 %v1311, %v1069
    %v1318 = vmul.f32 %v1311, %v1070
    %v1319 = vmul.f32 %v1311, %v1071
    %v1320 = vmul.f32 %v1315, %v1072
    %v1321 = vmul.f32 %v1315, %v1073
    %v1322 = vmul.f32 %v1315, %v1074
    %v1323 = vmul.f32 %v1315, %v1075
    %v1324 = vadd.f32 %v1300, %v1316
    %v1325 = vadd.f32 %v1301, %v1317
    %v1326 = vadd.f32 %v1302, %v1318
    %v1327 = vadd.f32 %v1303, %v1319
    %v1328 = vadd.f32 %v1304, %v1320
    %v1329 = vadd.f32 %v1305, %v1321
    %v1330 = vadd.f32 %v1306, %v1322
    %v1331 = vadd.f32 %v1307, %v1323
    %v1332 = vpack.c.bf16 %v1325, %v1324
    %v1333 = vpack.c.bf16 %v1327, %v1326
    %v1334 = vpack.c.bf16 %v1329, %v1328
    %v1335 = vpack.c.bf16 %v1331, %v1330
    %v1340 = vunpack.c.l.b16 %v1332
    %v1341 = vunpack.c.h.b16 %v1332
    %v1342 = vunpack.c.l.b16 %v1333
    %v1343 = vunpack.c.h.b16 %v1333
    %v1344 = vunpack.c.l.b16 %v1334
    %v1345 = vunpack.c.h.b16 %v1334
    %v1346 = vunpack.c.l.b16 %v1335
    %v1347 = vunpack.c.h.b16 %v1335
    %1348 = vset.pattern.permute.xlu0 0
    %1349 = vperm.xlu0 %1348, %v1340
    %v1350 = vpop.permute.xlu0 %1349
    %1351 = vset.pattern.permute.xlu0 0
    %1352 = vperm.xlu0 %1351, %v1341
    %v1353 = vpop.permute.xlu0 %1352
    %1354 = vset.pattern.permute.xlu0 0
    %1355 = vperm.xlu0 %1354, %v1342
    %v1356 = vpop.permute.xlu0 %1355
    %1357 = vset.pattern.permute.xlu0 0
    %1358 = vperm.xlu0 %1357, %v1343
    %v1359 = vpop.permute.xlu0 %1358
    %1360 = vset.pattern.permute.xlu0 0
    %1361 = vperm.xlu0 %1360, %v1344
    %v1362 = vpop.permute.xlu0 %1361
    %1363 = vset.pattern.permute.xlu0 0
    %1364 = vperm.xlu0 %1363, %v1345
    %v1365 = vpop.permute.xlu0 %1364
    %1366 = vset.pattern.permute.xlu0 0
    %1367 = vperm.xlu0 %1366, %v1346
    %v1368 = vpop.permute.xlu0 %1367
    %1369 = vset.pattern.permute.xlu0 0
    %1370 = vperm.xlu0 %1369, %v1347
    %v1371 = vpop.permute.xlu0 %1370
    %v1372 = vlaneseq
    %v1373 = vshrl.u32 %v1372, 7
    %v1374 = vsub.s32 %v101, %v1373
    %v1375 = vrot.slane %v1350, %v1374
    %v1376 = vlaneseq
    %v1377 = vshrl.u32 %v1376, 7
    %v1378 = vsub.s32 %v604, %v1377
    %v1379 = vrot.slane %v1353, %v1378
    %v1380 = vsel %vm609, %v1379, %v1375
    %v1381 = vlaneseq
    %v1382 = vshrl.u32 %v1381, 7
    %v1383 = vsub.s32 %v611, %v1382
    %v1384 = vrot.slane %v1356, %v1383
    %v1385 = vsel %vm616, %v1384, %v1380
    %v1386 = vlaneseq
    %v1387 = vshrl.u32 %v1386, 7
    %v1388 = vsub.s32 %v618, %v1387
    %v1389 = vrot.slane %v1359, %v1388
    %v1390 = vsel %vm623, %v1389, %v1385
    %v1391 = vlaneseq
    %v1392 = vshrl.u32 %v1391, 7
    %v1393 = vsub.s32 %v101, %v1392
    %v1394 = vrot.slane %v1362, %v1393
    %v1395 = vlaneseq
    %v1396 = vshrl.u32 %v1395, 7
    %v1397 = vsub.s32 %v604, %v1396
    %v1398 = vrot.slane %v1365, %v1397
    %v1399 = vsel %vm609, %v1398, %v1394
    %v1400 = vlaneseq
    %v1401 = vshrl.u32 %v1400, 7
    %v1402 = vsub.s32 %v611, %v1401
    %v1403 = vrot.slane %v1368, %v1402
    %v1404 = vsel %vm616, %v1403, %v1399
    %v1405 = vlaneseq
    %v1406 = vshrl.u32 %v1405, 7
    %v1407 = vsub.s32 %v618, %v1406
    %v1408 = vrot.slane %v1371, %v1407
    %v1409 = vsel %vm623, %v1408, %v1404
    %v1410 = vsel %vm239, %v1409, %v1390
    %v1411 = vpack.c.b16 %v1410, %v1410
    %v1413 = vsel %vm52, %v1411, 0
    %1415 = vmatprep.subr.bf16.mxu0 0
    %1416 = vmatpush1.bf16.msra.mxu0 0
    %1417 = vmatprep.subr.bf16.mxu0 0
    %1418 = vmatpush1.bf16.msra.mxu0 0
    %1419 = vmatprep.subr.bf16.mxu0 0
    %1420 = vmatpush1.bf16.msra.mxu0 0
    %1421 = vmatprep.subr.bf16.mxu0 0
    %1422 = vmatpush1.bf16.msra.mxu0 0
    %1423 = vmatprep.subr.bf16.mxu0 0
    %1424 = vmatpush1.bf16.msra.mxu0 0
    %1425 = vmatprep.subr.bf16.mxu0 0
    %1426 = vmatpush1.bf16.msra.mxu0 0
    %1427 = vmatprep.subr.bf16.mxu0 0
    %1428 = vmatpush1.bf16.msra.mxu0 %v383
    %1429 = vmatprep.subr.bf16.mxu0 0
    %1430 = vmatpush1.bf16.msra.mxu0 %v382
    %1431 = vmatprep.subr.bf16.mxu0 0
    %1432 = vmatpush2.bf16.msra.mxu0 0
    %1433 = vmatprep.subr.bf16.mxu0 0
    %1434 = vmatpush2.bf16.msra.mxu0 0
    %1435 = vmatprep.subr.bf16.mxu0 0
    %1436 = vmatpush2.bf16.msra.mxu0 0
    %1437 = vmatprep.subr.bf16.mxu0 0
    %1438 = vmatpush2.bf16.msra.mxu0 0
    %1439 = vmatprep.subr.bf16.mxu0 0
    %1440 = vmatpush2.bf16.msra.mxu0 0
    %1441 = vmatprep.subr.bf16.mxu0 0
    %1442 = vmatpush2.bf16.msra.mxu0 0
    %1443 = vmatprep.subr.bf16.mxu0 0
    %1444 = vmatpush2.bf16.msra.mxu0 0
    %1445 = vmatprep.subr.bf16.mxu0 0
    %1446 = vmatpush2.bf16.msra.mxu0 0
    %1447 = vmatprep.mubr.bf16.mxu0 0
    %1448 = vmatmul.mubr.bf16.gmra.mxu0 %v1413
    %v1449 = vpop.f32.mrf.mxu0
    %v1450 = vadd.f32 0.0, %v1449
    %v1451 = vpop.f32.mrf.mxu0
    %v1452 = vpop.f32.mrf.mxu0
    %v1453 = vpop.f32.mrf.mxu0
    %1454 = vdwg.mxu0
    %v1456 = vrot.slane %v1450, 4
    %v1457 = vrot.slane %v1450, 5
    %v1460 = vadd.f32 %v360, %v1456
    %v1461 = vadd.f32 %v363, %v1457
    %v1462 = vxor.u32 %v1460, 2147483648
    %v1463 = vxor.u32 %v1461, 2147483648
    %v1464 = vmul.f32 %v1462, 1.442695
    %v1465 = vpow.pop %v1464
    %v1466 = vmul.f32 %v1463, 1.442695
    %v1467 = vpow.pop %v1466
    %v1468 = vadd.f32 %v1465, 1.0
    %v1469 = vadd.f32 %v1467, 1.0
    %v1470 = vrcp.pop %v1468
    %v1471 = vmul.f32 1.0, %v1470
    %v1472 = vrcp.pop %v1469
    %v1473 = vmul.f32 1.0, %v1472
    %v1474 = vadd.f32 %v1450, %v449
    %v1476 = vrot.slane %v1474, 4
    %v1477 = vrot.slane %v1474, 5
    %1478 = vrot.lane.b32.xlu0 %v1476, 96
    %v1479 = vpop.permute.xlu0 %1478
    %1480 = vrot.lane.b32.xlu0 %v1477, 96
    %v1481 = vpop.permute.xlu0 %1480
    %v1484 = vmul.f32 %v1471, %v1479
    %v1485 = vmul.f32 %v1473, %v1481
    %1488 = vrot.lane.b32.xlu0 %v1484, 32
    %v1489 = vpop.permute.xlu0 %1488
    %1490 = vrot.lane.b32.xlu0 %v1485, 32
    %v1491 = vpop.permute.xlu0 %1490
    %v1494 = vadd.f32 %v360, %v1489
    %v1495 = vadd.f32 %v363, %v1491
    %v1496 = vtanh.pop %v1494
    %v1497 = vtanh.pop %v1495
    %v1498 = vlaneseq
    %v1499 = vshrl.u32 %v1498, 7
    %v1500 = vsub.s32 4, %v1499
    %v1501 = vrot.slane %v299, %v1500
    %v1502 = vlaneseq
    %v1503 = vshrl.u32 %v1502, 7
    %v1504 = vsub.s32 4, %v1503
    %v1505 = vrot.slane %v300, %v1504
    %v1508 = vlaneseq
    %v1509 = vshrl.u32 %v1508, 7
    %v1510 = vsub.s32 4, %v1509
    %v1511 = vrot.slane %v1496, %v1510
    %s1513 = sor.u32 256, 32
    %1514 = vbcast.lane.b32.xlu0 %v1511, %s1513
    %v1515 = vpop.permute.xlu0 %1514
    %s1517 = sor.u32 256, 40
    %1518 = vbcast.lane.b32.xlu0 %v1511, %s1517
    %v1519 = vpop.permute.xlu0 %1518
    %s1521 = sor.u32 256, 48
    %1522 = vbcast.lane.b32.xlu0 %v1511, %s1521
    %v1523 = vpop.permute.xlu0 %1522
    %s1525 = sor.u32 256, 56
    %1526 = vbcast.lane.b32.xlu0 %v1511, %s1525
    %v1527 = vpop.permute.xlu0 %1526
    %v1528 = vlaneseq
    %v1529 = vshrl.u32 %v1528, 7
    %v1530 = vsub.s32 4, %v1529
    %v1531 = vrot.slane %v1497, %v1530
    %s1533 = sor.u32 256, 32
    %1534 = vbcast.lane.b32.xlu0 %v1531, %s1533
    %v1535 = vpop.permute.xlu0 %1534
    %s1537 = sor.u32 256, 40
    %1538 = vbcast.lane.b32.xlu0 %v1531, %s1537
    %v1539 = vpop.permute.xlu0 %1538
    %s1541 = sor.u32 256, 48
    %1542 = vbcast.lane.b32.xlu0 %v1531, %s1541
    %v1543 = vpop.permute.xlu0 %1542
    %s1545 = sor.u32 256, 56
    %1546 = vbcast.lane.b32.xlu0 %v1531, %s1545
    %v1547 = vpop.permute.xlu0 %1546
    %v1556 = vmul.f32 %v1501, %v1515
    %v1557 = vmul.f32 %v1501, %v1519
    %v1558 = vmul.f32 %v1501, %v1523
    %v1559 = vmul.f32 %v1501, %v1527
    %v1560 = vmul.f32 %v1505, %v1535
    %v1561 = vmul.f32 %v1505, %v1539
    %v1562 = vmul.f32 %v1505, %v1543
    %v1563 = vmul.f32 %v1505, %v1547
    %v1564 = vlaneseq
    %v1565 = vshrl.u32 %v1564, 7
    %v1566 = vsub.s32 4, %v1565
    %v1567 = vrot.slane %v540, %v1566
    %v1568 = vlaneseq
    %v1569 = vshrl.u32 %v1568, 7
    %v1570 = vsub.s32 4, %v1569
    %v1571 = vrot.slane %v541, %v1570
    %v1572 = vmul.f32 %v1567, %v1324
    %v1573 = vmul.f32 %v1567, %v1325
    %v1574 = vmul.f32 %v1567, %v1326
    %v1575 = vmul.f32 %v1567, %v1327
    %v1576 = vmul.f32 %v1571, %v1328
    %v1577 = vmul.f32 %v1571, %v1329
    %v1578 = vmul.f32 %v1571, %v1330
    %v1579 = vmul.f32 %v1571, %v1331
    %v1580 = vadd.f32 %v1556, %v1572
    %v1581 = vadd.f32 %v1557, %v1573
    %v1582 = vadd.f32 %v1558, %v1574
    %v1583 = vadd.f32 %v1559, %v1575
    %v1584 = vadd.f32 %v1560, %v1576
    %v1585 = vadd.f32 %v1561, %v1577
    %v1586 = vadd.f32 %v1562, %v1578
    %v1587 = vadd.f32 %v1563, %v1579
    %v1588 = vpack.c.bf16 %v1581, %v1580
    %v1589 = vpack.c.bf16 %v1583, %v1582
    %v1590 = vpack.c.bf16 %v1585, %v1584
    %v1591 = vpack.c.bf16 %v1587, %v1586
    %v1596 = vunpack.c.l.b16 %v1588
    %v1597 = vunpack.c.h.b16 %v1588
    %v1598 = vunpack.c.l.b16 %v1589
    %v1599 = vunpack.c.h.b16 %v1589
    %v1600 = vunpack.c.l.b16 %v1590
    %v1601 = vunpack.c.h.b16 %v1590
    %v1602 = vunpack.c.l.b16 %v1591
    %v1603 = vunpack.c.h.b16 %v1591
    %1604 = vset.pattern.permute.xlu0 0
    %1605 = vperm.xlu0 %1604, %v1596
    %v1606 = vpop.permute.xlu0 %1605
    %1607 = vset.pattern.permute.xlu0 0
    %1608 = vperm.xlu0 %1607, %v1597
    %v1609 = vpop.permute.xlu0 %1608
    %1610 = vset.pattern.permute.xlu0 0
    %1611 = vperm.xlu0 %1610, %v1598
    %v1612 = vpop.permute.xlu0 %1611
    %1613 = vset.pattern.permute.xlu0 0
    %1614 = vperm.xlu0 %1613, %v1599
    %v1615 = vpop.permute.xlu0 %1614
    %1616 = vset.pattern.permute.xlu0 0
    %1617 = vperm.xlu0 %1616, %v1600
    %v1618 = vpop.permute.xlu0 %1617
    %1619 = vset.pattern.permute.xlu0 0
    %1620 = vperm.xlu0 %1619, %v1601
    %v1621 = vpop.permute.xlu0 %1620
    %1622 = vset.pattern.permute.xlu0 0
    %1623 = vperm.xlu0 %1622, %v1602
    %v1624 = vpop.permute.xlu0 %1623
    %1625 = vset.pattern.permute.xlu0 0
    %1626 = vperm.xlu0 %1625, %v1603
    %v1627 = vpop.permute.xlu0 %1626
    %v1628 = vlaneseq
    %v1629 = vshrl.u32 %v1628, 7
    %v1630 = vsub.s32 %v101, %v1629
    %v1631 = vrot.slane %v1606, %v1630
    %v1632 = vlaneseq
    %v1633 = vshrl.u32 %v1632, 7
    %v1634 = vsub.s32 %v604, %v1633
    %v1635 = vrot.slane %v1609, %v1634
    %v1636 = vsel %vm609, %v1635, %v1631
    %v1637 = vlaneseq
    %v1638 = vshrl.u32 %v1637, 7
    %v1639 = vsub.s32 %v611, %v1638
    %v1640 = vrot.slane %v1612, %v1639
    %v1641 = vsel %vm616, %v1640, %v1636
    %v1642 = vlaneseq
    %v1643 = vshrl.u32 %v1642, 7
    %v1644 = vsub.s32 %v618, %v1643
    %v1645 = vrot.slane %v1615, %v1644
    %v1646 = vsel %vm623, %v1645, %v1641
    %v1647 = vlaneseq
    %v1648 = vshrl.u32 %v1647, 7
    %v1649 = vsub.s32 %v101, %v1648
    %v1650 = vrot.slane %v1618, %v1649
    %v1651 = vlaneseq
    %v1652 = vshrl.u32 %v1651, 7
    %v1653 = vsub.s32 %v604, %v1652
    %v1654 = vrot.slane %v1621, %v1653
    %v1655 = vsel %vm609, %v1654, %v1650
    %v1656 = vlaneseq
    %v1657 = vshrl.u32 %v1656, 7
    %v1658 = vsub.s32 %v611, %v1657
    %v1659 = vrot.slane %v1624, %v1658
    %v1660 = vsel %vm616, %v1659, %v1655
    %v1661 = vlaneseq
    %v1662 = vshrl.u32 %v1661, 7
    %v1663 = vsub.s32 %v618, %v1662
    %v1664 = vrot.slane %v1627, %v1663
    %v1665 = vsel %vm623, %v1664, %v1660
    %v1666 = vsel %vm239, %v1665, %v1646
    %v1667 = vpack.c.b16 %v1666, %v1666
    %v1669 = vsel %vm52, %v1667, 0
    %1671 = vmatprep.subr.bf16.mxu0 0
    %1672 = vmatpush1.bf16.msra.mxu0 0
    %1673 = vmatprep.subr.bf16.mxu0 0
    %1674 = vmatpush1.bf16.msra.mxu0 0
    %1675 = vmatprep.subr.bf16.mxu0 0
    %1676 = vmatpush1.bf16.msra.mxu0 0
    %1677 = vmatprep.subr.bf16.mxu0 0
    %1678 = vmatpush1.bf16.msra.mxu0 0
    %1679 = vmatprep.subr.bf16.mxu0 0
    %1680 = vmatpush1.bf16.msra.mxu0 0
    %1681 = vmatprep.subr.bf16.mxu0 0
    %1682 = vmatpush1.bf16.msra.mxu0 0
    %1683 = vmatprep.subr.bf16.mxu0 0
    %1684 = vmatpush1.bf16.msra.mxu0 %v383
    %1685 = vmatprep.subr.bf16.mxu0 0
    %1686 = vmatpush1.bf16.msra.mxu0 %v382
    %1687 = vmatprep.subr.bf16.mxu0 0
    %1688 = vmatpush2.bf16.msra.mxu0 0
    %1689 = vmatprep.subr.bf16.mxu0 0
    %1690 = vmatpush2.bf16.msra.mxu0 0
    %1691 = vmatprep.subr.bf16.mxu0 0
    %1692 = vmatpush2.bf16.msra.mxu0 0
    %1693 = vmatprep.subr.bf16.mxu0 0
    %1694 = vmatpush2.bf16.msra.mxu0 0
    %1695 = vmatprep.subr.bf16.mxu0 0
    %1696 = vmatpush2.bf16.msra.mxu0 0
    %1697 = vmatprep.subr.bf16.mxu0 0
    %1698 = vmatpush2.bf16.msra.mxu0 0
    %1699 = vmatprep.subr.bf16.mxu0 0
    %1700 = vmatpush2.bf16.msra.mxu0 0
    %1701 = vmatprep.subr.bf16.mxu0 0
    %1702 = vmatpush2.bf16.msra.mxu0 0
    %1703 = vmatprep.mubr.bf16.mxu0 0
    %1704 = vmatmul.mubr.bf16.gmra.mxu0 %v1669
    %v1705 = vpop.f32.mrf.mxu0
    %v1706 = vadd.f32 0.0, %v1705
    %v1707 = vpop.f32.mrf.mxu0
    %v1708 = vpop.f32.mrf.mxu0
    %v1709 = vpop.f32.mrf.mxu0
    %1710 = vdwg.mxu0
    %v1712 = vrot.slane %v1706, 3
    %v1713 = vrot.slane %v1706, 4
    %v1716 = vadd.f32 %v360, %v1712
    %v1717 = vadd.f32 %v363, %v1713
    %v1718 = vxor.u32 %v1716, 2147483648
    %v1719 = vxor.u32 %v1717, 2147483648
    %v1720 = vmul.f32 %v1718, 1.442695
    %v1721 = vpow.pop %v1720
    %v1722 = vmul.f32 %v1719, 1.442695
    %v1723 = vpow.pop %v1722
    %v1724 = vadd.f32 %v1721, 1.0
    %v1725 = vadd.f32 %v1723, 1.0
    %v1726 = vrcp.pop %v1724
    %v1727 = vmul.f32 1.0, %v1726
    %v1728 = vrcp.pop %v1725
    %v1729 = vmul.f32 1.0, %v1728
    %v1730 = vadd.f32 %v1706, %v449
    %v1732 = vrot.slane %v1730, 3
    %v1733 = vrot.slane %v1730, 4
    %1734 = vrot.lane.b32.xlu0 %v1732, 96
    %v1735 = vpop.permute.xlu0 %1734
    %1736 = vrot.lane.b32.xlu0 %v1733, 96
    %v1737 = vpop.permute.xlu0 %1736
    %v1740 = vmul.f32 %v1727, %v1735
    %v1741 = vmul.f32 %v1729, %v1737
    %1744 = vrot.lane.b32.xlu0 %v1740, 32
    %v1745 = vpop.permute.xlu0 %1744
    %1746 = vrot.lane.b32.xlu0 %v1741, 32
    %v1747 = vpop.permute.xlu0 %1746
    %v1750 = vadd.f32 %v360, %v1745
    %v1751 = vadd.f32 %v363, %v1747
    %v1752 = vtanh.pop %v1750
    %v1753 = vtanh.pop %v1751
    %v1754 = vlaneseq
    %v1755 = vshrl.u32 %v1754, 7
    %v1756 = vsub.s32 5, %v1755
    %v1757 = vrot.slane %v299, %v1756
    %v1758 = vlaneseq
    %v1759 = vshrl.u32 %v1758, 7
    %v1760 = vsub.s32 5, %v1759
    %v1761 = vrot.slane %v300, %v1760
    %v1764 = vlaneseq
    %v1765 = vshrl.u32 %v1764, 7
    %v1766 = vsub.s32 5, %v1765
    %v1767 = vrot.slane %v1752, %v1766
    %s1769 = sor.u32 256, 32
    %1770 = vbcast.lane.b32.xlu0 %v1767, %s1769
    %v1771 = vpop.permute.xlu0 %1770
    %s1773 = sor.u32 256, 40
    %1774 = vbcast.lane.b32.xlu0 %v1767, %s1773
    %v1775 = vpop.permute.xlu0 %1774
    %s1777 = sor.u32 256, 48
    %1778 = vbcast.lane.b32.xlu0 %v1767, %s1777
    %v1779 = vpop.permute.xlu0 %1778
    %s1781 = sor.u32 256, 56
    %1782 = vbcast.lane.b32.xlu0 %v1767, %s1781
    %v1783 = vpop.permute.xlu0 %1782
    %v1784 = vlaneseq
    %v1785 = vshrl.u32 %v1784, 7
    %v1786 = vsub.s32 5, %v1785
    %v1787 = vrot.slane %v1753, %v1786
    %s1789 = sor.u32 256, 32
    %1790 = vbcast.lane.b32.xlu0 %v1787, %s1789
    %v1791 = vpop.permute.xlu0 %1790
    %s1793 = sor.u32 256, 40
    %1794 = vbcast.lane.b32.xlu0 %v1787, %s1793
    %v1795 = vpop.permute.xlu0 %1794
    %s1797 = sor.u32 256, 48
    %1798 = vbcast.lane.b32.xlu0 %v1787, %s1797
    %v1799 = vpop.permute.xlu0 %1798
    %s1801 = sor.u32 256, 56
    %1802 = vbcast.lane.b32.xlu0 %v1787, %s1801
    %v1803 = vpop.permute.xlu0 %1802
    %v1812 = vmul.f32 %v1757, %v1771
    %v1813 = vmul.f32 %v1757, %v1775
    %v1814 = vmul.f32 %v1757, %v1779
    %v1815 = vmul.f32 %v1757, %v1783
    %v1816 = vmul.f32 %v1761, %v1791
    %v1817 = vmul.f32 %v1761, %v1795
    %v1818 = vmul.f32 %v1761, %v1799
    %v1819 = vmul.f32 %v1761, %v1803
    %v1820 = vlaneseq
    %v1821 = vshrl.u32 %v1820, 7
    %v1822 = vsub.s32 5, %v1821
    %v1823 = vrot.slane %v540, %v1822
    %v1824 = vlaneseq
    %v1825 = vshrl.u32 %v1824, 7
    %v1826 = vsub.s32 5, %v1825
    %v1827 = vrot.slane %v541, %v1826
    %v1828 = vmul.f32 %v1823, %v1580
    %v1829 = vmul.f32 %v1823, %v1581
    %v1830 = vmul.f32 %v1823, %v1582
    %v1831 = vmul.f32 %v1823, %v1583
    %v1832 = vmul.f32 %v1827, %v1584
    %v1833 = vmul.f32 %v1827, %v1585
    %v1834 = vmul.f32 %v1827, %v1586
    %v1835 = vmul.f32 %v1827, %v1587
    %v1836 = vadd.f32 %v1812, %v1828
    %v1837 = vadd.f32 %v1813, %v1829
    %v1838 = vadd.f32 %v1814, %v1830
    %v1839 = vadd.f32 %v1815, %v1831
    %v1840 = vadd.f32 %v1816, %v1832
    %v1841 = vadd.f32 %v1817, %v1833
    %v1842 = vadd.f32 %v1818, %v1834
    %v1843 = vadd.f32 %v1819, %v1835
    %v1844 = vpack.c.bf16 %v1837, %v1836
    %v1845 = vpack.c.bf16 %v1839, %v1838
    %v1846 = vpack.c.bf16 %v1841, %v1840
    %v1847 = vpack.c.bf16 %v1843, %v1842
    %v1852 = vunpack.c.l.b16 %v1844
    %v1853 = vunpack.c.h.b16 %v1844
    %v1854 = vunpack.c.l.b16 %v1845
    %v1855 = vunpack.c.h.b16 %v1845
    %v1856 = vunpack.c.l.b16 %v1846
    %v1857 = vunpack.c.h.b16 %v1846
    %v1858 = vunpack.c.l.b16 %v1847
    %v1859 = vunpack.c.h.b16 %v1847
    %1860 = vset.pattern.permute.xlu0 0
    %1861 = vperm.xlu0 %1860, %v1852
    %v1862 = vpop.permute.xlu0 %1861
    %1863 = vset.pattern.permute.xlu0 0
    %1864 = vperm.xlu0 %1863, %v1853
    %v1865 = vpop.permute.xlu0 %1864
    %1866 = vset.pattern.permute.xlu0 0
    %1867 = vperm.xlu0 %1866, %v1854
    %v1868 = vpop.permute.xlu0 %1867
    %1869 = vset.pattern.permute.xlu0 0
    %1870 = vperm.xlu0 %1869, %v1855
    %v1871 = vpop.permute.xlu0 %1870
    %1872 = vset.pattern.permute.xlu0 0
    %1873 = vperm.xlu0 %1872, %v1856
    %v1874 = vpop.permute.xlu0 %1873
    %1875 = vset.pattern.permute.xlu0 0
    %1876 = vperm.xlu0 %1875, %v1857
    %v1877 = vpop.permute.xlu0 %1876
    %1878 = vset.pattern.permute.xlu0 0
    %1879 = vperm.xlu0 %1878, %v1858
    %v1880 = vpop.permute.xlu0 %1879
    %1881 = vset.pattern.permute.xlu0 0
    %1882 = vperm.xlu0 %1881, %v1859
    %v1883 = vpop.permute.xlu0 %1882
    %v1884 = vlaneseq
    %v1885 = vshrl.u32 %v1884, 7
    %v1886 = vsub.s32 %v101, %v1885
    %v1887 = vrot.slane %v1862, %v1886
    %v1888 = vlaneseq
    %v1889 = vshrl.u32 %v1888, 7
    %v1890 = vsub.s32 %v604, %v1889
    %v1891 = vrot.slane %v1865, %v1890
    %v1892 = vsel %vm609, %v1891, %v1887
    %v1893 = vlaneseq
    %v1894 = vshrl.u32 %v1893, 7
    %v1895 = vsub.s32 %v611, %v1894
    %v1896 = vrot.slane %v1868, %v1895
    %v1897 = vsel %vm616, %v1896, %v1892
    %v1898 = vlaneseq
    %v1899 = vshrl.u32 %v1898, 7
    %v1900 = vsub.s32 %v618, %v1899
    %v1901 = vrot.slane %v1871, %v1900
    %v1902 = vsel %vm623, %v1901, %v1897
    %v1903 = vlaneseq
    %v1904 = vshrl.u32 %v1903, 7
    %v1905 = vsub.s32 %v101, %v1904
    %v1906 = vrot.slane %v1874, %v1905
    %v1907 = vlaneseq
    %v1908 = vshrl.u32 %v1907, 7
    %v1909 = vsub.s32 %v604, %v1908
    %v1910 = vrot.slane %v1877, %v1909
    %v1911 = vsel %vm609, %v1910, %v1906
    %v1912 = vlaneseq
    %v1913 = vshrl.u32 %v1912, 7
    %v1914 = vsub.s32 %v611, %v1913
    %v1915 = vrot.slane %v1880, %v1914
    %v1916 = vsel %vm616, %v1915, %v1911
    %v1917 = vlaneseq
    %v1918 = vshrl.u32 %v1917, 7
    %v1919 = vsub.s32 %v618, %v1918
    %v1920 = vrot.slane %v1883, %v1919
    %v1921 = vsel %vm623, %v1920, %v1916
    %v1922 = vsel %vm239, %v1921, %v1902
    %v1923 = vpack.c.b16 %v1922, %v1922
    %v1925 = vsel %vm52, %v1923, 0
    %1927 = vmatprep.subr.bf16.mxu0 0
    %1928 = vmatpush1.bf16.msra.mxu0 0
    %1929 = vmatprep.subr.bf16.mxu0 0
    %1930 = vmatpush1.bf16.msra.mxu0 0
    %1931 = vmatprep.subr.bf16.mxu0 0
    %1932 = vmatpush1.bf16.msra.mxu0 0
    %1933 = vmatprep.subr.bf16.mxu0 0
    %1934 = vmatpush1.bf16.msra.mxu0 0
    %1935 = vmatprep.subr.bf16.mxu0 0
    %1936 = vmatpush1.bf16.msra.mxu0 0
    %1937 = vmatprep.subr.bf16.mxu0 0
    %1938 = vmatpush1.bf16.msra.mxu0 0
    %1939 = vmatprep.subr.bf16.mxu0 0
    %1940 = vmatpush1.bf16.msra.mxu0 %v383
    %1941 = vmatprep.subr.bf16.mxu0 0
    %1942 = vmatpush1.bf16.msra.mxu0 %v382
    %1943 = vmatprep.subr.bf16.mxu0 0
    %1944 = vmatpush2.bf16.msra.mxu0 0
    %1945 = vmatprep.subr.bf16.mxu0 0
    %1946 = vmatpush2.bf16.msra.mxu0 0
    %1947 = vmatprep.subr.bf16.mxu0 0
    %1948 = vmatpush2.bf16.msra.mxu0 0
    %1949 = vmatprep.subr.bf16.mxu0 0
    %1950 = vmatpush2.bf16.msra.mxu0 0
    %1951 = vmatprep.subr.bf16.mxu0 0
    %1952 = vmatpush2.bf16.msra.mxu0 0
    %1953 = vmatprep.subr.bf16.mxu0 0
    %1954 = vmatpush2.bf16.msra.mxu0 0
    %1955 = vmatprep.subr.bf16.mxu0 0
    %1956 = vmatpush2.bf16.msra.mxu0 0
    %1957 = vmatprep.subr.bf16.mxu0 0
    %1958 = vmatpush2.bf16.msra.mxu0 0
    %1959 = vmatprep.mubr.bf16.mxu0 0
    %1960 = vmatmul.mubr.bf16.gmra.mxu0 %v1925
    %v1961 = vpop.f32.mrf.mxu0
    %v1962 = vadd.f32 0.0, %v1961
    %v1963 = vpop.f32.mrf.mxu0
    %v1964 = vpop.f32.mrf.mxu0
    %v1965 = vpop.f32.mrf.mxu0
    %1966 = vdwg.mxu0
    %v1968 = vrot.slane %v1962, 2
    %v1969 = vrot.slane %v1962, 3
    %v1972 = vadd.f32 %v360, %v1968
    %v1973 = vadd.f32 %v363, %v1969
    %v1974 = vxor.u32 %v1972, 2147483648
    %v1975 = vxor.u32 %v1973, 2147483648
    %v1976 = vmul.f32 %v1974, 1.442695
    %v1977 = vpow.pop %v1976
    %v1978 = vmul.f32 %v1975, 1.442695
    %v1979 = vpow.pop %v1978
    %v1980 = vadd.f32 %v1977, 1.0
    %v1981 = vadd.f32 %v1979, 1.0
    %v1982 = vrcp.pop %v1980
    %v1983 = vmul.f32 1.0, %v1982
    %v1984 = vrcp.pop %v1981
    %v1985 = vmul.f32 1.0, %v1984
    %v1986 = vadd.f32 %v1962, %v449
    %v1988 = vrot.slane %v1986, 2
    %v1989 = vrot.slane %v1986, 3
    %1990 = vrot.lane.b32.xlu0 %v1988, 96
    %v1991 = vpop.permute.xlu0 %1990
    %1992 = vrot.lane.b32.xlu0 %v1989, 96
    %v1993 = vpop.permute.xlu0 %1992
    %v1996 = vmul.f32 %v1983, %v1991
    %v1997 = vmul.f32 %v1985, %v1993
    %2000 = vrot.lane.b32.xlu0 %v1996, 32
    %v2001 = vpop.permute.xlu0 %2000
    %2002 = vrot.lane.b32.xlu0 %v1997, 32
    %v2003 = vpop.permute.xlu0 %2002
    %v2006 = vadd.f32 %v360, %v2001
    %v2007 = vadd.f32 %v363, %v2003
    %v2008 = vtanh.pop %v2006
    %v2009 = vtanh.pop %v2007
    %v2010 = vlaneseq
    %v2011 = vshrl.u32 %v2010, 7
    %v2012 = vsub.s32 6, %v2011
    %v2013 = vrot.slane %v299, %v2012
    %v2014 = vlaneseq
    %v2015 = vshrl.u32 %v2014, 7
    %v2016 = vsub.s32 6, %v2015
    %v2017 = vrot.slane %v300, %v2016
    %v2020 = vlaneseq
    %v2021 = vshrl.u32 %v2020, 7
    %v2022 = vsub.s32 6, %v2021
    %v2023 = vrot.slane %v2008, %v2022
    %s2025 = sor.u32 256, 32
    %2026 = vbcast.lane.b32.xlu0 %v2023, %s2025
    %v2027 = vpop.permute.xlu0 %2026
    %s2029 = sor.u32 256, 40
    %2030 = vbcast.lane.b32.xlu0 %v2023, %s2029
    %v2031 = vpop.permute.xlu0 %2030
    %s2033 = sor.u32 256, 48
    %2034 = vbcast.lane.b32.xlu0 %v2023, %s2033
    %v2035 = vpop.permute.xlu0 %2034
    %s2037 = sor.u32 256, 56
    %2038 = vbcast.lane.b32.xlu0 %v2023, %s2037
    %v2039 = vpop.permute.xlu0 %2038
    %v2040 = vlaneseq
    %v2041 = vshrl.u32 %v2040, 7
    %v2042 = vsub.s32 6, %v2041
    %v2043 = vrot.slane %v2009, %v2042
    %s2045 = sor.u32 256, 32
    %2046 = vbcast.lane.b32.xlu0 %v2043, %s2045
    %v2047 = vpop.permute.xlu0 %2046
    %s2049 = sor.u32 256, 40
    %2050 = vbcast.lane.b32.xlu0 %v2043, %s2049
    %v2051 = vpop.permute.xlu0 %2050
    %s2053 = sor.u32 256, 48
    %2054 = vbcast.lane.b32.xlu0 %v2043, %s2053
    %v2055 = vpop.permute.xlu0 %2054
    %s2057 = sor.u32 256, 56
    %2058 = vbcast.lane.b32.xlu0 %v2043, %s2057
    %v2059 = vpop.permute.xlu0 %2058
    %v2068 = vmul.f32 %v2013, %v2027
    %v2069 = vmul.f32 %v2013, %v2031
    %v2070 = vmul.f32 %v2013, %v2035
    %v2071 = vmul.f32 %v2013, %v2039
    %v2072 = vmul.f32 %v2017, %v2047
    %v2073 = vmul.f32 %v2017, %v2051
    %v2074 = vmul.f32 %v2017, %v2055
    %v2075 = vmul.f32 %v2017, %v2059
    %v2076 = vlaneseq
    %v2077 = vshrl.u32 %v2076, 7
    %v2078 = vsub.s32 6, %v2077
    %v2079 = vrot.slane %v540, %v2078
    %v2080 = vlaneseq
    %v2081 = vshrl.u32 %v2080, 7
    %v2082 = vsub.s32 6, %v2081
    %v2083 = vrot.slane %v541, %v2082
    %v2084 = vmul.f32 %v2079, %v1836
    %v2085 = vmul.f32 %v2079, %v1837
    %v2086 = vmul.f32 %v2079, %v1838
    %v2087 = vmul.f32 %v2079, %v1839
    %v2088 = vmul.f32 %v2083, %v1840
    %v2089 = vmul.f32 %v2083, %v1841
    %v2090 = vmul.f32 %v2083, %v1842
    %v2091 = vmul.f32 %v2083, %v1843
    %v2092 = vadd.f32 %v2068, %v2084
    %v2093 = vadd.f32 %v2069, %v2085
    %v2094 = vadd.f32 %v2070, %v2086
    %v2095 = vadd.f32 %v2071, %v2087
    %v2096 = vadd.f32 %v2072, %v2088
    %v2097 = vadd.f32 %v2073, %v2089
    %v2098 = vadd.f32 %v2074, %v2090
    %v2099 = vadd.f32 %v2075, %v2091
    %v2100 = vpack.c.bf16 %v2093, %v2092
    %v2101 = vpack.c.bf16 %v2095, %v2094
    %v2102 = vpack.c.bf16 %v2097, %v2096
    %v2103 = vpack.c.bf16 %v2099, %v2098
    %v2108 = vunpack.c.l.b16 %v2100
    %v2109 = vunpack.c.h.b16 %v2100
    %v2110 = vunpack.c.l.b16 %v2101
    %v2111 = vunpack.c.h.b16 %v2101
    %v2112 = vunpack.c.l.b16 %v2102
    %v2113 = vunpack.c.h.b16 %v2102
    %v2114 = vunpack.c.l.b16 %v2103
    %v2115 = vunpack.c.h.b16 %v2103
    %2116 = vset.pattern.permute.xlu0 0
    %2117 = vperm.xlu0 %2116, %v2108
    %v2118 = vpop.permute.xlu0 %2117
    %2119 = vset.pattern.permute.xlu0 0
    %2120 = vperm.xlu0 %2119, %v2109
    %v2121 = vpop.permute.xlu0 %2120
    %2122 = vset.pattern.permute.xlu0 0
    %2123 = vperm.xlu0 %2122, %v2110
    %v2124 = vpop.permute.xlu0 %2123
    %2125 = vset.pattern.permute.xlu0 0
    %2126 = vperm.xlu0 %2125, %v2111
    %v2127 = vpop.permute.xlu0 %2126
    %2128 = vset.pattern.permute.xlu0 0
    %2129 = vperm.xlu0 %2128, %v2112
    %v2130 = vpop.permute.xlu0 %2129
    %2131 = vset.pattern.permute.xlu0 0
    %2132 = vperm.xlu0 %2131, %v2113
    %v2133 = vpop.permute.xlu0 %2132
    %2134 = vset.pattern.permute.xlu0 0
    %2135 = vperm.xlu0 %2134, %v2114
    %v2136 = vpop.permute.xlu0 %2135
    %2137 = vset.pattern.permute.xlu0 0
    %2138 = vperm.xlu0 %2137, %v2115
    %v2139 = vpop.permute.xlu0 %2138
    %v2140 = vlaneseq
    %v2141 = vshrl.u32 %v2140, 7
    %v2142 = vsub.s32 %v101, %v2141
    %v2143 = vrot.slane %v2118, %v2142
    %v2144 = vlaneseq
    %v2145 = vshrl.u32 %v2144, 7
    %v2146 = vsub.s32 %v604, %v2145
    %v2147 = vrot.slane %v2121, %v2146
    %v2148 = vsel %vm609, %v2147, %v2143
    %v2149 = vlaneseq
    %v2150 = vshrl.u32 %v2149, 7
    %v2151 = vsub.s32 %v611, %v2150
    %v2152 = vrot.slane %v2124, %v2151
    %v2153 = vsel %vm616, %v2152, %v2148
    %v2154 = vlaneseq
    %v2155 = vshrl.u32 %v2154, 7
    %v2156 = vsub.s32 %v618, %v2155
    %v2157 = vrot.slane %v2127, %v2156
    %v2158 = vsel %vm623, %v2157, %v2153
    %v2159 = vlaneseq
    %v2160 = vshrl.u32 %v2159, 7
    %v2161 = vsub.s32 %v101, %v2160
    %v2162 = vrot.slane %v2130, %v2161
    %v2163 = vlaneseq
    %v2164 = vshrl.u32 %v2163, 7
    %v2165 = vsub.s32 %v604, %v2164
    %v2166 = vrot.slane %v2133, %v2165
    %v2167 = vsel %vm609, %v2166, %v2162
    %v2168 = vlaneseq
    %v2169 = vshrl.u32 %v2168, 7
    %v2170 = vsub.s32 %v611, %v2169
    %v2171 = vrot.slane %v2136, %v2170
    %v2172 = vsel %vm616, %v2171, %v2167
    %v2173 = vlaneseq
    %v2174 = vshrl.u32 %v2173, 7
    %v2175 = vsub.s32 %v618, %v2174
    %v2176 = vrot.slane %v2139, %v2175
    %v2177 = vsel %vm623, %v2176, %v2172
    %v2178 = vsel %vm239, %v2177, %v2158
    %v2179 = vpack.c.b16 %v2178, %v2178
    %v2181 = vsel %vm52, %v2179, 0
    %2183 = vmatprep.subr.bf16.mxu0 0
    %2184 = vmatpush1.bf16.msra.mxu0 0
    %2185 = vmatprep.subr.bf16.mxu0 0
    %2186 = vmatpush1.bf16.msra.mxu0 0
    %2187 = vmatprep.subr.bf16.mxu0 0
    %2188 = vmatpush1.bf16.msra.mxu0 0
    %2189 = vmatprep.subr.bf16.mxu0 0
    %2190 = vmatpush1.bf16.msra.mxu0 0
    %2191 = vmatprep.subr.bf16.mxu0 0
    %2192 = vmatpush1.bf16.msra.mxu0 0
    %2193 = vmatprep.subr.bf16.mxu0 0
    %2194 = vmatpush1.bf16.msra.mxu0 0
    %2195 = vmatprep.subr.bf16.mxu0 0
    %2196 = vmatpush1.bf16.msra.mxu0 %v383
    %2197 = vmatprep.subr.bf16.mxu0 0
    %2198 = vmatpush1.bf16.msra.mxu0 %v382
    %2199 = vmatprep.subr.bf16.mxu0 0
    %2200 = vmatpush2.bf16.msra.mxu0 0
    %2201 = vmatprep.subr.bf16.mxu0 0
    %2202 = vmatpush2.bf16.msra.mxu0 0
    %2203 = vmatprep.subr.bf16.mxu0 0
    %2204 = vmatpush2.bf16.msra.mxu0 0
    %2205 = vmatprep.subr.bf16.mxu0 0
    %2206 = vmatpush2.bf16.msra.mxu0 0
    %2207 = vmatprep.subr.bf16.mxu0 0
    %2208 = vmatpush2.bf16.msra.mxu0 0
    %2209 = vmatprep.subr.bf16.mxu0 0
    %2210 = vmatpush2.bf16.msra.mxu0 0
    %2211 = vmatprep.subr.bf16.mxu0 0
    %2212 = vmatpush2.bf16.msra.mxu0 0
    %2213 = vmatprep.subr.bf16.mxu0 0
    %2214 = vmatpush2.bf16.msra.mxu0 0
    %2215 = vmatprep.mubr.bf16.mxu0 0
    %2216 = vmatmul.mubr.bf16.gmra.mxu0 %v2181
    %v2217 = vpop.f32.mrf.mxu0
    %v2218 = vadd.f32 0.0, %v2217
    %v2219 = vpop.f32.mrf.mxu0
    %v2220 = vpop.f32.mrf.mxu0
    %v2221 = vpop.f32.mrf.mxu0
    %2222 = vdwg.mxu0
    %v2224 = vrot.slane %v2218, 1
    %v2225 = vrot.slane %v2218, 2
    %v2228 = vadd.f32 %v360, %v2224
    %v2229 = vadd.f32 %v363, %v2225
    %v2230 = vxor.u32 %v2228, 2147483648
    %v2231 = vxor.u32 %v2229, 2147483648
    %v2232 = vmul.f32 %v2230, 1.442695
    %v2233 = vpow.pop %v2232
    %v2234 = vmul.f32 %v2231, 1.442695
    %v2235 = vpow.pop %v2234
    %v2236 = vadd.f32 %v2233, 1.0
    %v2237 = vadd.f32 %v2235, 1.0
    %v2238 = vrcp.pop %v2236
    %v2239 = vmul.f32 1.0, %v2238
    %v2240 = vrcp.pop %v2237
    %v2241 = vmul.f32 1.0, %v2240
    %v2242 = vadd.f32 %v2218, %v449
    %v2244 = vrot.slane %v2242, 1
    %v2245 = vrot.slane %v2242, 2
    %2246 = vrot.lane.b32.xlu0 %v2244, 96
    %v2247 = vpop.permute.xlu0 %2246
    %2248 = vrot.lane.b32.xlu0 %v2245, 96
    %v2249 = vpop.permute.xlu0 %2248
    %v2252 = vmul.f32 %v2239, %v2247
    %v2253 = vmul.f32 %v2241, %v2249
    %2256 = vrot.lane.b32.xlu0 %v2252, 32
    %v2257 = vpop.permute.xlu0 %2256
    %2258 = vrot.lane.b32.xlu0 %v2253, 32
    %v2259 = vpop.permute.xlu0 %2258
    %v2262 = vadd.f32 %v360, %v2257
    %v2263 = vadd.f32 %v363, %v2259
    %v2264 = vtanh.pop %v2262
    %v2265 = vtanh.pop %v2263
    %v2266 = vlaneseq
    %v2267 = vshrl.u32 %v2266, 7
    %v2268 = vsub.s32 7, %v2267
    %v2269 = vrot.slane %v299, %v2268
    %v2270 = vlaneseq
    %v2271 = vshrl.u32 %v2270, 7
    %v2272 = vsub.s32 7, %v2271
    %v2273 = vrot.slane %v300, %v2272
    %v2276 = vlaneseq
    %v2277 = vshrl.u32 %v2276, 7
    %v2278 = vsub.s32 7, %v2277
    %v2279 = vrot.slane %v2264, %v2278
    %s2281 = sor.u32 256, 32
    %2282 = vbcast.lane.b32.xlu0 %v2279, %s2281
    %v2283 = vpop.permute.xlu0 %2282
    %s2285 = sor.u32 256, 40
    %2286 = vbcast.lane.b32.xlu0 %v2279, %s2285
    %v2287 = vpop.permute.xlu0 %2286
    %s2289 = sor.u32 256, 48
    %2290 = vbcast.lane.b32.xlu0 %v2279, %s2289
    %v2291 = vpop.permute.xlu0 %2290
    %s2293 = sor.u32 256, 56
    %2294 = vbcast.lane.b32.xlu0 %v2279, %s2293
    %v2295 = vpop.permute.xlu0 %2294
    %v2296 = vlaneseq
    %v2297 = vshrl.u32 %v2296, 7
    %v2298 = vsub.s32 7, %v2297
    %v2299 = vrot.slane %v2265, %v2298
    %s2301 = sor.u32 256, 32
    %2302 = vbcast.lane.b32.xlu0 %v2299, %s2301
    %v2303 = vpop.permute.xlu0 %2302
    %s2305 = sor.u32 256, 40
    %2306 = vbcast.lane.b32.xlu0 %v2299, %s2305
    %v2307 = vpop.permute.xlu0 %2306
    %s2309 = sor.u32 256, 48
    %2310 = vbcast.lane.b32.xlu0 %v2299, %s2309
    %v2311 = vpop.permute.xlu0 %2310
    %s2313 = sor.u32 256, 56
    %2314 = vbcast.lane.b32.xlu0 %v2299, %s2313
    %v2315 = vpop.permute.xlu0 %2314
    %v2324 = vmul.f32 %v2269, %v2283
    %v2325 = vmul.f32 %v2269, %v2287
    %v2326 = vmul.f32 %v2269, %v2291
    %v2327 = vmul.f32 %v2269, %v2295
    %v2328 = vmul.f32 %v2273, %v2303
    %v2329 = vmul.f32 %v2273, %v2307
    %v2330 = vmul.f32 %v2273, %v2311
    %v2331 = vmul.f32 %v2273, %v2315
    %v2332 = vlaneseq
    %v2333 = vshrl.u32 %v2332, 7
    %v2334 = vsub.s32 7, %v2333
    %v2335 = vrot.slane %v540, %v2334
    %v2336 = vlaneseq
    %v2337 = vshrl.u32 %v2336, 7
    %v2338 = vsub.s32 7, %v2337
    %v2339 = vrot.slane %v541, %v2338
    %v2340 = vmul.f32 %v2335, %v2092
    %v2341 = vmul.f32 %v2335, %v2093
    %v2342 = vmul.f32 %v2335, %v2094
    %v2343 = vmul.f32 %v2335, %v2095
    %v2344 = vmul.f32 %v2339, %v2096
    %v2345 = vmul.f32 %v2339, %v2097
    %v2346 = vmul.f32 %v2339, %v2098
    %v2347 = vmul.f32 %v2339, %v2099
    %v2348 = vadd.f32 %v2324, %v2340
    %v2349 = vadd.f32 %v2325, %v2341
    %v2350 = vadd.f32 %v2326, %v2342
    %v2351 = vadd.f32 %v2327, %v2343
    %v2352 = vadd.f32 %v2328, %v2344
    %v2353 = vadd.f32 %v2329, %v2345
    %v2354 = vadd.f32 %v2330, %v2346
    %v2355 = vadd.f32 %v2331, %v2347
    %2356 = vrot.lane.b32.xlu0 %v30, 96
    %v2357 = vpop.permute.xlu0 %2356
    %2367 = vset.pattern.permute.xlu0 0
    %2368 = vperm.xlu0 %2367, %v2348
    %v2369 = vpop.permute.xlu0 %2368
    %2370 = vset.pattern.permute.xlu0 0
    %2371 = vperm.xlu0 %2370, %v2349
    %v2372 = vpop.permute.xlu0 %2371
    %2373 = vset.pattern.permute.xlu0 0
    %2374 = vperm.xlu0 %2373, %v2350
    %v2375 = vpop.permute.xlu0 %2374
    %2376 = vset.pattern.permute.xlu0 0
    %2377 = vperm.xlu0 %2376, %v2351
    %v2378 = vpop.permute.xlu0 %2377
    %2379 = vset.pattern.permute.xlu0 0
    %2380 = vperm.xlu0 %2379, %v2352
    %v2381 = vpop.permute.xlu0 %2380
    %2382 = vset.pattern.permute.xlu0 0
    %2383 = vperm.xlu0 %2382, %v2353
    %v2384 = vpop.permute.xlu0 %2383
    %2385 = vset.pattern.permute.xlu0 0
    %2386 = vperm.xlu0 %2385, %v2354
    %v2387 = vpop.permute.xlu0 %2386
    %2388 = vset.pattern.permute.xlu0 0
    %2389 = vperm.xlu0 %2388, %v2355
    %v2390 = vpop.permute.xlu0 %2389
    %v2391 = vadd.s32 %v101, 4294967232
    %v2392 = vlaneseq
    %v2393 = vshrl.u32 %v2392, 7
    %v2394 = vsub.s32 %v2391, %v2393
    %v2395 = vrot.slane %v2369, %v2394
    %v2396 = vadd.s32 %v101, 4294967224
    %v2397 = vlaneseq
    %v2398 = vshrl.u32 %v2397, 7
    %v2399 = vsub.s32 %v2396, %v2398
    %v2400 = vrot.slane %v2372, %v2399
    %vm2401 = vcmask 654912
    %v2402 = vsel %vm2401, %v2400, %v2395
    %v2403 = vadd.s32 %v101, 4294967216
    %v2404 = vlaneseq
    %v2405 = vshrl.u32 %v2404, 7
    %v2406 = vsub.s32 %v2403, %v2405
    %v2407 = vrot.slane %v2375, %v2406
    %vm2408 = vcmask 720512
    %v2409 = vsel %vm2408, %v2407, %v2402
    %v2410 = vadd.s32 %v101, 4294967208
    %v2411 = vlaneseq
    %v2412 = vshrl.u32 %v2411, 7
    %v2413 = vsub.s32 %v2410, %v2412
    %v2414 = vrot.slane %v2378, %v2413
    %vm2415 = vcmask 786112
    %v2416 = vsel %vm2415, %v2414, %v2409
    %v2417 = vlaneseq
    %v2418 = vshrl.u32 %v2417, 7
    %v2419 = vsub.s32 %v2391, %v2418
    %v2420 = vrot.slane %v2381, %v2419
    %v2421 = vlaneseq
    %v2422 = vshrl.u32 %v2421, 7
    %v2423 = vsub.s32 %v2396, %v2422
    %v2424 = vrot.slane %v2384, %v2423
    %v2425 = vsel %vm2401, %v2424, %v2420
    %v2426 = vlaneseq
    %v2427 = vshrl.u32 %v2426, 7
    %v2428 = vsub.s32 %v2403, %v2427
    %v2429 = vrot.slane %v2387, %v2428
    %v2430 = vsel %vm2408, %v2429, %v2425
    %v2431 = vlaneseq
    %v2432 = vshrl.u32 %v2431, 7
    %v2433 = vsub.s32 %v2410, %v2432
    %v2434 = vrot.slane %v2390, %v2433
    %v2435 = vsel %vm2415, %v2434, %v2430
    %v2436 = vsel %vm239, %v2435, %v2416
    %v2438 = vsel %vm55, %v2357, %v2436
    %v2439 = vpack.c.bf16 %v2438, %v2438
    %v2440 = vld [vmem:[%s5] sm:$0xf]
    %v2441 = vld [vmem:[%s5 + $0x4] sm:$0xf]
    %v2442 = vld [vmem:[%s5 + $0x8] sm:$0xf]
    %v2443 = vld [vmem:[%s5 + $0xc] sm:$0xf]
    %v2444 = vld [vmem:[%s5 + $0x10] sm:$0xf]
    %v2445 = vld [vmem:[%s5 + $0x14] sm:$0xf]
    %v2446 = vld [vmem:[%s5 + $0x18] sm:$0xf]
    %v2447 = vld [vmem:[%s5 + $0x1c] sm:$0xf]
    %v2448 = vld [vmem:[%s5 + $0x20] sm:$0xf]
    %v2449 = vld [vmem:[%s5 + $0x24] sm:$0xf]
    %v2450 = vld [vmem:[%s5 + $0x28] sm:$0xf]
    %v2451 = vld [vmem:[%s5 + $0x2c] sm:$0xf]
    %v2452 = vlaneseq
    %v2453 = vshrl.u32 %v2452, 7
    %v2454 = vsub.s32 4, %v2453
    %v2455 = vrot.slane %v31, %v2454
    %v2468 = vunpack.c.l.b16 %v2440
    %v2469 = vunpack.c.l.b16 %v2441
    %v2470 = vunpack.c.l.b16 %v2442
    %v2471 = vunpack.c.l.b16 %v2443
    %v2472 = vunpack.c.l.b16 %v2444
    %v2473 = vunpack.c.l.b16 %v2445
    %v2474 = vunpack.c.l.b16 %v2446
    %v2475 = vunpack.c.l.b16 %v2447
    %v2476 = vunpack.c.l.b16 %v2448
    %v2477 = vunpack.c.l.b16 %v2449
    %v2478 = vunpack.c.l.b16 %v2450
    %v2479 = vunpack.c.l.b16 %v2451
    %v2480 = vpack.c.b16 %v2469, %v2468
    %v2481 = vpack.c.b16 %v2471, %v2470
    %v2482 = vpack.c.b16 %v2473, %v2472
    %v2483 = vpack.c.b16 %v2475, %v2474
    %v2484 = vpack.c.b16 %v2477, %v2476
    %v2485 = vpack.c.b16 %v2479, %v2478
    %v2493 = vsel %vm58, %v2439, 0
    %2495 = vmatprep.subr.bf16.mxu0 0
    %2496 = vmatpush1.bf16.msra.mxu0 0
    %2497 = vmatprep.subr.bf16.mxu0 0
    %2498 = vmatpush1.bf16.msra.mxu0 0
    %2499 = vmatprep.subr.bf16.mxu0 0
    %2500 = vmatpush1.bf16.msra.mxu0 %v2485
    %2501 = vmatprep.subr.bf16.mxu0 0
    %2502 = vmatpush1.bf16.msra.mxu0 %v2484
    %2503 = vmatprep.subr.bf16.mxu0 0
    %2504 = vmatpush1.bf16.msra.mxu0 %v2483
    %2505 = vmatprep.subr.bf16.mxu0 0
    %2506 = vmatpush1.bf16.msra.mxu0 %v2482
    %2507 = vmatprep.subr.bf16.mxu0 0
    %2508 = vmatpush1.bf16.msra.mxu0 %v2481
    %2509 = vmatprep.subr.bf16.mxu0 0
    %2510 = vmatpush1.bf16.msra.mxu0 %v2480
    %2511 = vmatprep.subr.bf16.mxu0 0
    %2512 = vmatpush2.bf16.msra.mxu0 0
    %2513 = vmatprep.subr.bf16.mxu0 0
    %2514 = vmatpush2.bf16.msra.mxu0 0
    %2515 = vmatprep.subr.bf16.mxu0 0
    %2516 = vmatpush2.bf16.msra.mxu0 0
    %2517 = vmatprep.subr.bf16.mxu0 0
    %2518 = vmatpush2.bf16.msra.mxu0 0
    %2519 = vmatprep.subr.bf16.mxu0 0
    %2520 = vmatpush2.bf16.msra.mxu0 0
    %2521 = vmatprep.subr.bf16.mxu0 0
    %2522 = vmatpush2.bf16.msra.mxu0 0
    %2523 = vmatprep.subr.bf16.mxu0 0
    %2524 = vmatpush2.bf16.msra.mxu0 0
    %2525 = vmatprep.subr.bf16.mxu0 0
    %2526 = vmatpush2.bf16.msra.mxu0 0
    %2527 = vmatprep.mubr.bf16.mxu0 0
    %2528 = vmatmul.mubr.bf16.gmra.mxu0 %v2493
    %v2529 = vpop.f32.mrf.mxu0
    %v2530 = vadd.f32 %v2455, %v2529
    %v2531 = vpop.f32.mrf.mxu0
    %v2532 = vpop.f32.mrf.mxu0
    %v2533 = vpop.f32.mrf.mxu0
    %2534 = vdwg.mxu0
    %v2535 = vmax.f32 %v2530, 0.0
    %vm2536 = vcmask 254976
    %2537 = vst.msk [vmem:[#allocation2] sm:$0x3] %vm2536, %v2535
    // Predicated region
    $region30: #{tpu_custom_call.1} parent=1 // pred_check
      _
    $region31: #{tpu_custom_call.1} parent=1 // pred_check_branch
      %2539 = sbr.rel (0) target = $region33
    $region32: #{tpu_custom_call.1} parent=1 // pred_region
      %s2541 = ssub.s32 32, 32
      %2542 = vsyncadd [#allocation3], %s2541
      %s2544 = sshll.u32 [#allocation2], 4
      %s2545 = int_to_ptr.vmem [resolvable:$true] %s2544
      %2547 = dma.vmem_to_hbm [thread:$0]  %s2545, 32, %s7, [#allocation3]
    $region33: #{tpu_custom_call.1} parent=1 // pred_fallthru
      _
    // Predicated region
    $region34: #{tpu_custom_call.1} parent=1 // pred_check
      _
    $region35: #{tpu_custom_call.1} parent=1 // pred_check_branch
      %2549 = sbr.rel (0) target = $region37
    $region36: #{tpu_custom_call.1} parent=1 // pred_region
      %2550 = dma.done [#allocation3], 32
    $region37: #{tpu_custom_call.1} parent=1 // pred_fallthru
      _
    %2551 = vsyncpa [#allocation3], 1

</llo_original>
